<compile_context>
chip_gen: v5e
topology: v5e:2x2
jax: 0.10.0
libtpu: 0.0.40
codegen_flags: <defaults>
</compile_context>

<pallas_src>
import functools

import jax
import jax.numpy as jnp
from jax.experimental import pallas as pl
from jax.experimental.pallas import tpu as pltpu


def _round_up(x, m):
    return ((x + m - 1) // m) * m


def _lane_tile(n, max_tile=512):
    """Lane-dim tile: full dim when < 128 (always legal), else a 128-multiple <= max_tile."""
    if n < 128:
        return n
    return min(max_tile, _round_up(n, 128))


# ----------------------------------------------------------------------------
# Conv3d: flipped (Co x spatial) matmul, full-K block, fused bias, bf16 output
# ----------------------------------------------------------------------------

def _conv_mm_kernel(w_ref, col_ref, b_ref, o_ref):
    acc = jnp.dot(w_ref[...], col_ref[0], preferred_element_type=jnp.float32)
    o_ref[0] = (acc + b_ref[...]).astype(o_ref.dtype)


def conv3d(x, w, b):
    """Valid 3-D convolution (PyTorch Conv3d semantics).  x:(B,Ci,D,H,W) -> (B,Co,Do,Ho,Wo) bf16."""
    B, Ci, D, H, W = x.shape
    Co, _, KD, KH, KW = w.shape
    Do, Ho, Wo = D - KD + 1, H - KH + 1, W - KW + 1
    K = Ci * KD * KH * KW
    N = Do * Ho * Wo

    xb = x.astype(jnp.bfloat16)
    taps = [xb[:, :, kd:kd + Do, kh:kh + Ho, kw:kw + Wo]
            for kd in range(KD) for kh in range(KH) for kw in range(KW)]
    col = jnp.stack(taps, axis=2).reshape(B, K, N)        # (B, Ci*K^3, spatial); K idx = ci*K3+tap

    w2 = w.reshape(Co, K).astype(jnp.bfloat16)             # same K ordering as col
    b2 = b.astype(jnp.float32).reshape(Co, 1)

    tn = _lane_tile(N)
    out = pl.pallas_call(
        _conv_mm_kernel,
        grid=(B, pl.cdiv(N, tn)),
        in_specs=[
            pl.BlockSpec((Co, K), lambda bi, j: (0, 0)),
            pl.BlockSpec((1, K, tn), lambda bi, j: (bi, 0, j)),
            pl.BlockSpec((Co, 1), lambda bi, j: (0, 0)),
        ],
        out_specs=pl.BlockSpec((1, Co, tn), lambda bi, j: (bi, 0, j)),
        out_shape=jax.ShapeDtypeStruct((B, Co, N), jnp.bfloat16),
        compiler_params=pltpu.CompilerParams(
            dimension_semantics=("parallel", "parallel")),
    )(w2, col, b2)
    return out.reshape(B, Co, Do, Ho, Wo)


# ----------------------------------------------------------------------------
# MaxPool3d(2,2) + ReLU: 8 strided views as separate operands, no stack/pad copy
# ----------------------------------------------------------------------------

def _max8_relu_kernel(v0, v1, v2, v3, v4, v5, v6, v7, o_ref):
    m01 = jnp.maximum(v0[...], v1[...])
    m23 = jnp.maximum(v2[...], v3[...])
    m45 = jnp.maximum(v4[...], v5[...])
    m67 = jnp.maximum(v6[...], v7[...])
    m = jnp.maximum(jnp.maximum(m01, m23), jnp.maximum(m45, m67))
    o_ref[...] = jnp.maximum(m, 0)


def pallas_maxpool2_relu(x):
    """MaxPool3d(kernel=2, stride=2, floor) + ReLU.  x:(B,C,D,H,W) -> (B,C,D//2,H//2,W//2)."""
    B, C, D, H, W = x.shape
    Do, Ho, Wo = D // 2, H // 2, W // 2
    R, N = B * C, Do * Ho * Wo
    views = [x[:, :, d0:2 * Do:2, h0:2 * Ho:2, w0:2 * Wo:2].reshape(R, N)
             for d0 in range(2) for h0 in range(2) for w0 in range(2)]

    tn = _lane_tile(N)
    spec = pl.BlockSpec((R, tn), lambda j: (0, j))
    out = pl.pallas_call(
        _max8_relu_kernel,
        grid=(pl.cdiv(N, tn),),
        in_specs=[spec] * 8,
        out_specs=spec,
        out_shape=jax.ShapeDtypeStruct((R, N), x.dtype),
        compiler_params=pltpu.CompilerParams(dimension_semantics=("parallel",)),
    )(*views)
    return out.reshape(B, C, Do, Ho, Wo)


# ----------------------------------------------------------------------------
# fc_loc: fc1+ReLU -> fc2+ReLU -> fc3+ReLU fused in a single kernel
# ----------------------------------------------------------------------------

def _fc_loc_kernel(xs_ref, w1_ref, b1_ref, w2_ref, b2_ref, w3_ref, b3_ref,
                   o_ref, h1_acc):
    @pl.when(pl.program_id(0) == 0)
    def _():
        h1_acc[...] = jnp.zeros_like(h1_acc)

    h1_acc[...] += jnp.dot(xs_ref[...], w1_ref[...],
                           preferred_element_type=jnp.float32)

    @pl.when(pl.program_id(0) == pl.num_programs(0) - 1)
    def _():
        h1 = jnp.maximum(h1_acc[...] + b1_ref[...], 0.0)
        h2 = jnp.dot(h1.astype(jnp.bfloat16), w2_ref[...],
                     preferred_element_type=jnp.float32)
        h2 = jnp.maximum(h2 + b2_ref[...], 0.0)
        h3 = jnp.dot(h2.astype(jnp.bfloat16), w3_ref[...],
                     preferred_element_type=jnp.float32)
        o_ref[...] = jnp.maximum(h3 + b3_ref[...], 0.0)


def pallas_fc_loc(xs, w1, b1, w2, b2, w3, b3):
    """Fused fc_loc.  xs:(B,F); weights stored pre-transposed (in,out).  Returns (B, 6) f32."""
    B, F = xs.shape
    N1, N2, N3 = w1.shape[1], w2.shape[1], w3.shape[1]
    Bp = _round_up(max(B, 8), 8)

    if F <= 2048:                       # single full-dim K block: no K padding needed
        tk, Fp = F, F
        xs_p = jnp.pad(xs.astype(jnp.bfloat16), ((0, Bp - B), (0, 0)))
        w1_p = w1.astype(jnp.bfloat16)
    else:                               # large flat-feature case: tile K, zero-pad (exact zeros)
        tk = 512
        Fp = _round_up(F, tk)
        xs_p = jnp.pad(xs.astype(jnp.bfloat16), ((0, Bp - B), (0, Fp - F)))
        w1_p = jnp.pad(w1.astype(jnp.bfloat16), ((0, Fp - F), (0, 0)))

    out = pl.pallas_call(
        _fc_loc_kernel,
        grid=(Fp // tk,),
        in_specs=[
            pl.BlockSpec((Bp, tk), lambda k: (0, k)),
            pl.BlockSpec((tk, N1), lambda k: (k, 0)),
            pl.BlockSpec((1, N1), lambda k: (0, 0)),
            pl.BlockSpec((N1, N2), lambda k: (0, 0)),
            pl.BlockSpec((1, N2), lambda k: (0, 0)),
            pl.BlockSpec((N2, N3), lambda k: (0, 0)),
            pl.BlockSpec((1, N3), lambda k: (0, 0)),
        ],
        out_specs=pl.BlockSpec((Bp, N3), lambda k: (0, 0)),
        out_shape=jax.ShapeDtypeStruct((Bp, N3), jnp.float32),
        scratch_shapes=[pltpu.VMEM((Bp, N1), jnp.float32)],
        compiler_params=pltpu.CompilerParams(dimension_semantics=("arbitrary",)),
    )(xs_p, w1_p,
      b1.astype(jnp.float32).reshape(1, N1),
      w2.astype(jnp.bfloat16), b2.astype(jnp.float32).reshape(1, N2),
      w3.astype(jnp.bfloat16), b3.astype(jnp.float32).reshape(1, N3))
    return out[:B]


# ----------------------------------------------------------------------------
# Batched matmul with broadcast-batched LHS (for the separable grid_sample)
# ----------------------------------------------------------------------------

def _bmm_group_kernel(a_ref, b_ref, o_ref, *, group):
    a = a_ref[0]
    for i in range(group):
        o_ref[i] = jnp.dot(a, b_ref[i], preferred_element_type=jnp.float32)


def pallas_bmm_bcast(a, b, a_div=1, group=1, tm=512, tn=512):
    """out[g] = a[g // a_div] @ b[g].

    a: (Ga, M, K), b: (G, K, N), Ga * a_div == G.  `group` consecutive g's are processed per grid
    step (they must share one `a` block, i.e. group | a_div).  K is one full-dim block; M and N use
    cdiv grids with remainder masking (no padding of the big operands).  f32 in/out.
    """
    Ga, M, K = a.shape
    G, K2, N = b.shape
    assert K == K2 and Ga * a_div == G and G % group == 0
    if group > 1:
        assert a_div % group == 0

    tm = M if M <= tm else tm
    tn = _lane_tile(N, tn)

    kern = functools.partial(_bmm_group_kernel, group=group)
    return pl.pallas_call(
        kern,
        grid=(G // group, pl.cdiv(M, tm), pl.cdiv(N, tn)),
        in_specs=[
            pl.BlockSpec((1, tm, K), lambda g, mi, ni: ((g * group) // a_div, mi, 0)),
            pl.BlockSpec((group, K, tn), lambda g, mi, ni: (g, 0, ni)),
        ],
        out_specs=pl.BlockSpec((group, tm, tn), lambda g, mi, ni: (g, mi, ni)),
        out_shape=jax.ShapeDtypeStruct((G, M, N), jnp.float32),
        compiler_params=pltpu.CompilerParams(
            dimension_semantics=("parallel", "parallel", "parallel")),
    )(a, b)


# ----------------------------------------------------------------------------
# affine_grid + grid_sample (diagonal theta) via separable interpolation matmuls
# ----------------------------------------------------------------------------

def _interp_matrix(g, size):
    """Per-axis linear interpolation matrix for grid_sample(align_corners=False, zeros padding).
    g: (B, N_out) normalized coords in [-1,1]; returns (B, N_out, size), f32."""
    x = ((g + 1.0) * size - 1.0) / 2.0
    x0 = jnp.floor(x)
    w1 = x - x0
    w0 = 1.0 - w1
    i0 = x0.astype(jnp.int32)
    i1 = i0 + 1
    v0 = ((i0 >= 0) & (i0 < size)).astype(jnp.float32)
    v1 = ((i1 >= 0) & (i1 < size)).astype(jnp.float32)
    oh0 = jax.nn.one_hot(jnp.clip(i0, 0, size - 1), size, dtype=jnp.float32)
    oh1 = jax.nn.one_hot(jnp.clip(i1, 0, size - 1), size, dtype=jnp.float32)
    return (w0 * v0)[..., None] * oh0 + (w1 * v1)[..., None] * oh1


def affine_grid_sample(x, theta):
    """F.grid_sample(x, F.affine_grid(theta, x.shape, align_corners=False), 'bilinear',
    align_corners=False) for the diagonal theta produced by net3D.  theta row 0 is the
    affine_grid x-coordinate (samples the W axis), row 2 is the z-coordinate (samples D),
    matching the reference module.  Three zero-transpose Pallas bmm passes (f32)."""
    B, C, D, H, W = x.shape
    base = lambda n: (2.0 * jnp.arange(n, dtype=jnp.float32) + 1.0) / n - 1.0
    gx = theta[:, 0, 0:1] * base(W)[None, :] + theta[:, 0, 3:4]    # samples along W
    gy = theta[:, 1, 1:2] * base(H)[None, :] + theta[:, 1, 3:4]    # samples along H
    gz = theta[:, 2, 2:3] * base(D)[None, :] + theta[:, 2, 3:4]    # samples along D
    Ax = _interp_matrix(gx, W)    # (B, W_out, W_in)
    Ay = _interp_matrix(gy, H)    # (B, H_out, H_in)
    Az = _interp_matrix(gz, D)    # (B, D_out, D_in)

    x32 = x.astype(jnp.float32)
    # pass 1: contract input-W (right-mult by Ax^T); output stays (B, C, D, H, W') contiguous
    t1 = pallas_bmm_bcast(x32.reshape(B, C * D * H, W), jnp.swapaxes(Ax, 1, 2))
    # pass 2: contract input-H (left-mult by Ay, broadcast over the C*D slices via index_map)
    gb = 8 if (C * D) % 8 == 0 else 1
    t2 = pallas_bmm_bcast(Ay, t1.reshape(B * C * D, H, W), a_div=C * D, group=gb)
    # pass 3: contract input-D (left-mult by Az, broadcast over C); result is already NCDHW
    t3 = pallas_bmm_bcast(Az, t2.reshape(B * C, D, H * W), a_div=C)
    return t3.reshape(B, C, D, H, W)


# ----------------------------------------------------------------------------
# Parameters and forward pass
# ----------------------------------------------------------------------------

def init_params(key, channel_dim, patch_size):
    P0, P1, P2 = patch_size
    flat = 10 * int(P0 / 4 - 4) * int(P1 / 4 - 4) * int(P2 / 4 - 4)
    ks = jax.random.split(key, 8)

    def nrm(k, shape, scale=0.05):
        return (scale * jax.random.normal(k, shape)).astype(jnp.float32)

    # FC weights are stored pre-transposed as (in, out) so no per-forward .T is needed.
    return dict(
        conv1_w=nrm(ks[0], (8, channel_dim, 7, 7, 7)),
        conv1_b=nrm(ks[1], (8,)),
        conv2_w=nrm(ks[2], (10, 8, 5, 5, 5)),
        conv2_b=nrm(ks[3], (10,)),
        fc1_w=nrm(ks[4], (flat, 1024)),
        fc1_b=nrm(ks[5], (1024,)),
        fc2_w=nrm(ks[6], (1024, 32)),
        fc2_b=nrm(ks[7], (32,)),
        # fc_loc[4]: weight zeroed, bias = crop box init (as in the module's __init__)
        fc3_w=jnp.zeros((32, 6), jnp.float32),
        fc3_b=jnp.array([P0 / 4, P0 * 3 / 4, P1 / 4, P1 * 3 / 4, P2 / 4, P2 * 3 / 4],
                        dtype=jnp.float32),
    )


def net3d_forward(im, params, mode="normal"):
    assert mode == "normal"  # TODO(synk): 'security' mode (per-sample branching) not implemented
    B, C, D, H, W = im.shape

    # localization: Conv3d(k7) -> MaxPool3d(2,2)+ReLU -> Conv3d(k5) -> MaxPool3d(2,2)+ReLU
    xs = conv3d(im, params["conv1_w"], params["conv1_b"])
    xs = pallas_maxpool2_relu(xs)
    xs = conv3d(xs, params["conv2_w"], params["conv2_b"])
    xs = pallas_maxpool2_relu(xs)
    xs = xs.reshape(B, -1)

    # fc_loc: Linear->ReLU->Linear->ReLU->Linear->ReLU (fused kernel)
    sz = pallas_fc_loc(xs, params["fc1_w"], params["fc1_b"],
                       params["fc2_w"], params["fc2_b"],
                       params["fc3_w"], params["fc3_b"])          # (B, 6)

    theta = jnp.zeros((B, 3, 4), jnp.float32)
    theta = theta.at[:, 0, 0].set((sz[:, 1] - sz[:, 0]) / (D * 1.0) + 1e-20)
    theta = theta.at[:, 0, 3].set((sz[:, 1] + sz[:, 0]) / (D * 1.0) - 1.0)
    theta = theta.at[:, 1, 1].set((sz[:, 3] - sz[:, 2]) / (H * 1.0) + 1e-20)
    theta = theta.at[:, 1, 3].set((sz[:, 3] + sz[:, 2]) / (H * 1.0) - 1.0)
    theta = theta.at[:, 2, 2].set((sz[:, 5] - sz[:, 4]) / (W * 1.0) + 1e-20)
    theta = theta.at[:, 2, 3].set((sz[:, 5] + sz[:, 4]) / (W * 1.0) - 1.0)

    cropped = affine_grid_sample(im, theta)
    return cropped, theta


if __name__ == "__main__":
    key = jax.random.PRNGKey(0)
    k_im, k_par = jax.random.split(key)

    channel_dim = 1
    patch_size = (24, 24, 24)      # smallest clean size: 10*(24/4-4)^3 = 80 flat features
    batch = 2

    im = jax.random.normal(k_im, (batch, channel_dim) + patch_size, dtype=jnp.float32)
    params = init_params(k_par, channel_dim, patch_size)

    cropped, theta = net3d_forward(im, params, mode="normal")
    jax.block_until_ready((cropped, theta))

    assert cropped.shape == im.shape, cropped.shape
    assert theta.shape == (batch, 3, 4), theta.shape
    assert bool(jnp.all(jnp.isfinite(cropped))) and bool(jnp.all(jnp.isfinite(theta)))
    print("KERNEL_OK")
</pallas_src>

<mosaic_0001>
module attributes {stable_mosaic.version = 11 : i64} {
  func.func @_conv_mm_kernel(%arg0: i32, %arg1: i32, %arg2: memref<8x343xbf16, #tpu.memory_space<vmem>>, %arg3: memref<1x343x512xbf16, #tpu.memory_space<vmem>>, %arg4: memref<8x1xf32, #tpu.memory_space<vmem>>, %arg5: memref<1x8x512xbf16, #tpu.memory_space<vmem>>) attributes {dimension_semantics = [#tpu.dimension_semantics<parallel>, #tpu.dimension_semantics<parallel>], iteration_bounds = array<i64: 2, 12>, scalar_prefetch = 0 : i64, scratch_operands = 0 : i64, tpu.core_type = #tpu.core_type<tc>, window_params = [{pipeline_mode = #tpu.pipeline_mode<synchronous>, transform_indices = @transform_0, window_bounds = array<i64: 8, 343>}, {transform_indices = @transform_1, window_bounds = array<i64: 1, 343, 512>}, {pipeline_mode = #tpu.pipeline_mode<synchronous>, transform_indices = @transform_2, window_bounds = array<i64: 8, 1>}, {transform_indices = @transform_3, window_bounds = array<i64: 1, 8, 512>}]} {
    %c0 = arith.constant 0 : index
    %c0_0 = arith.constant 0 : index
    %0 = vector.load %arg2[%c0, %c0_0] : memref<8x343xbf16, #tpu.memory_space<vmem>>, vector<8x343xbf16>
    %c0_1 = arith.constant 0 : index
    %c0_2 = arith.constant 0 : index
    %c0_3 = arith.constant 0 : index
    %1 = vector.load %arg3[%c0_1, %c0_2, %c0_3] : memref<1x343x512xbf16, #tpu.memory_space<vmem>>, vector<1x343x512xbf16>
    %2 = vector.shape_cast %1 : vector<1x343x512xbf16> to vector<343x512xbf16>
    %cst = arith.constant dense<0.000000e+00> : vector<8x512xf32>
    %3 = tpu.matmul %0, %2, %cst {dimension_numbers = #tpu.dot_dimension_numbers<[1], [0], [0], [1], [0, 0, 1, 1], [], []>} : vector<8x343xbf16>, vector<343x512xbf16>, vector<8x512xf32> -> vector<8x512xf32>
    %c0_4 = arith.constant 0 : index
    %c0_5 = arith.constant 0 : index
    %4 = vector.load %arg4[%c0_4, %c0_5] : memref<8x1xf32, #tpu.memory_space<vmem>>, vector<8x1xf32>
    %5 = vector.broadcast %4 : vector<8x1xf32> to vector<8x512xf32>
    %6 = arith.addf %3, %5 : vector<8x512xf32>
    %7 = arith.truncf %6 : vector<8x512xf32> to vector<8x512xbf16>
    %c0_6 = arith.constant 0 : index
    %c0_7 = arith.constant 0 : index
    %c0_8 = arith.constant 0 : index
    %8 = vector.load %arg5[%c0_6, %c0_7, %c0_8] : memref<1x8x512xbf16, #tpu.memory_space<vmem>>, vector<1x8x512xbf16>
    %9 = vector.shape_cast %8 : vector<1x8x512xbf16> to vector<8x512xbf16>
    %10 = vector.shape_cast %7 : vector<8x512xbf16> to vector<1x8x512xbf16>
    tpu.vector_store %arg5[%c0_6, %c0_7, %c0_8], %10 {strides = array<i32>} : memref<1x8x512xbf16, #tpu.memory_space<vmem>>, vector<1x8x512xbf16>,
    return
  }
  func.func @transform_0(%arg0: i32, %arg1: i32) -> (i32, i32) {
    %c0_i32 = arith.constant 0 : i32
    %c0_i32_0 = arith.constant 0 : i32
    %c0_i32_1 = arith.constant 0 : i32
    return %c0_i32, %c0_i32_0 : i32, i32
  }
  func.func @transform_1(%arg0: i32, %arg1: i32) -> (i32, i32, i32) {
    %c0_i32 = arith.constant 0 : i32
    %c0_i32_0 = arith.constant 0 : i32
    return %arg0, %c0_i32, %arg1 : i32, i32, i32
  }
  func.func @transform_2(%arg0: i32, %arg1: i32) -> (i32, i32) {
    %c0_i32 = arith.constant 0 : i32
    %c0_i32_0 = arith.constant 0 : i32
    %c0_i32_1 = arith.constant 0 : i32
    return %c0_i32, %c0_i32_0 : i32, i32
  }
  func.func @transform_3(%arg0: i32, %arg1: i32) -> (i32, i32, i32) {
    %c0_i32 = arith.constant 0 : i32
    %c0_i32_0 = arith.constant 0 : i32
    return %arg0, %c0_i32, %arg1 : i32, i32, i32
  }
}

</mosaic_0001>

<llo_original>
// kernel: tpu_custom_call.1
$region0: #{tpu_custom_call.1}
  #allocation0 [shape = 'u32[]', space=smem, size = 0x4, offset = 0x4, fixed_abs, tag = 'smem constant byte address 0x4 - core index']
  #allocation1 [shape = 'u32[72,128]{1,0:T(1,128)}', space=vmem, size = 0x9000, scoped, tag = 'internal scratch']
  %s0 = inlined_call_operand.vmem [shape: bf16[8,343], index: 0, kind: input, shape index: {}]
  %s1 = inlined_call_operand.vmem [shape: bf16[2,343,5832], index: 1, kind: input, shape index: {}]
  %s2 = inlined_call_operand.vmem [shape: f32[8,1], index: 2, kind: input, shape index: {}]
  %s3 = inlined_call_operand.hbm [shape: bf16[2,8,5832], index: 3, kind: output, shape index: {}]
  %s4 = sld [smem:[#allocation0]]
  $region97: #{tpu_custom_call.1} parent=0
    _
  %s6 = ssub.s32 1, %s4
  %s7 = scalar_select 0, %s6, %s4
  $region1: #{tpu_custom_call.1} parent=0
    #allocation2 [shape = 'u8[704512]{0}', space=vmem, size = 0xac000, scoped, tag = 'input window, operand 1']
    #allocation3 [shape = 'u8[16384]{0}', space=vmem, size = 0x4000, scoped, tag = 'output window, operand 0']
    #allocation4 [shape = 's32[2]{0}', space=sflag, size = 0x8, scoped, tag = 'scoped memory for tpu_custom_call.1']
    %8 = vsyncpa [#allocation4], 0
    %s9 = scalar_lea.sflag [#allocation4], 1
    %10 = vsyncpa %s9, 0
    loop: start=0, step=1, limit=26
    $region2: #{tpu_custom_call.1} parent=1 // loop_pre_header
      _
    $region3: #{tpu_custom_call.1} parent=1 // loop_header
      %s12 = sphi 0, %s16
      %p13 = scmp.ge.s32.totalorder %s12, 26
      %s19 = sphi 0, %s31
      %s20 = sphi 0, %s27
      %s21 = sphi 0, %s19
      %s22 = sphi 0, %s20
      %s23 = sphi 0, %s21
      %s24 = sphi 0, %s22
      %s32 = sphi 0, %s32
      %s34 = sphi 0, %s32
      %s35 = sphi 0, %s34
      %s49 = sphi 0, %s35
      %s57 = sphi 0, %s59
      %s60 = sphi 0, %s57
      %s61 = sphi 0, %s60
      %s77 = sphi 0, %s61
      %s81 = sphi 0, %s81
      %s83 = sphi 0, %s81
      %s84 = sphi 0, %s83
      %s98 = sphi 0, %s84
      %s106 = sphi 0, %s108
      %s109 = sphi 0, %s106
      %s110 = sphi 0, %s109
      %s126 = sphi 0, %s110
    $region4: #{tpu_custom_call.1} parent=1 // loop_header_branch
      %15 = sbr.rel (%p13) target = $region8
    $region5: #{tpu_custom_call.1} parent=1 // loop_body
      %s17 = ssub.s32 %s12, 1
      %s18 = ssub.s32 %s12, 2
      %s25 = sadd.s32 1, %s20
      %p26 = scmp.ge.s32.totalorder %s25, 12
      %s27 = scalar_select %p26, 0, %s25
      %s28 = sadd.s32 1, %s19
      %s29 = scalar_select %p26, %s28, %s19
      %p30 = scmp.ge.s32.totalorder %s29, 2
      %s31 = scalar_select %p30, 0, %s29
      %s33 = sadd.s32 %s32, 1
      %p36 = scmp.eq.s32.totalorder %s12, 23
      %p37 = scmp.ne.s32.totalorder %s32, %s34
      %p38 = scmp.eq.s32.totalorder %s12, 0
      %p39 = por %p37, %p38
      %p40 = scmp.ne.s32.totalorder %s32, %s34
      %p41 = scmp.eq.s32.totalorder %s17, 23
      %p42 = por %p40, %p41
      %p43 = scmp.ne.s32.totalorder %s34, %s35
      %p44 = scmp.eq.s32.totalorder %s17, 0
      %p45 = por %p43, %p44
      %p46 = scmp.ne.s32.totalorder %s34, %s35
      %p47 = scmp.eq.s32.totalorder %s18, 23
      %p48 = por %p46, %p47
      %p50 = scmp.ne.s32.totalorder %s35, %s49
      %p51 = scmp.eq.s32.totalorder %s18, 0
      %p52 = por %p50, %p51
      %s53 = ssub.s32 %s19, %s31
      %s54 = ssub.s32 %s20, %s27
      %s55 = sor.u32 %s53, %s54
      %p56 = scmp.eq.s32.totalorder %s55, 0
      %s58 = sadd.s32 %s57, 1
      %s59 = scalar_select %p56, %s57, %s58
      %p62 = pneg %p56
      %p63 = scmp.eq.s32.totalorder %s12, 23
      %p64 = por %p62, %p63
      %p65 = scmp.ne.s32.totalorder %s57, %s60
      %p66 = scmp.eq.s32.totalorder %s12, 0
      %p67 = por %p65, %p66
      %p68 = scmp.ne.s32.totalorder %s57, %s60
      %p69 = scmp.eq.s32.totalorder %s17, 23
      %p70 = por %p68, %p69
      %p71 = scmp.ne.s32.totalorder %s60, %s61
      %p72 = scmp.eq.s32.totalorder %s17, 0
      %p73 = por %p71, %p72
      %p74 = scmp.ne.s32.totalorder %s60, %s61
      %p75 = scmp.eq.s32.totalorder %s18, 23
      %p76 = por %p74, %p75
      %p78 = scmp.ne.s32.totalorder %s61, %s77
      %p79 = scmp.eq.s32.totalorder %s18, 0
      %p80 = por %p78, %p79
      %s82 = sadd.s32 %s81, 1
      %p85 = scmp.eq.s32.totalorder %s12, 23
      %p86 = scmp.ne.s32.totalorder %s81, %s83
      %p87 = scmp.eq.s32.totalorder %s12, 0
      %p88 = por %p86, %p87
      %p89 = scmp.ne.s32.totalorder %s81, %s83
      %p90 = scmp.eq.s32.totalorder %s17, 23
      %p91 = por %p89, %p90
      %p92 = scmp.ne.s32.totalorder %s83, %s84
      %p93 = scmp.eq.s32.totalorder %s17, 0
      %p94 = por %p92, %p93
      %p95 = scmp.ne.s32.totalorder %s83, %s84
      %p96 = scmp.eq.s32.totalorder %s18, 23
      %p97 = por %p95, %p96
      %p99 = scmp.ne.s32.totalorder %s84, %s98
      %p100 = scmp.eq.s32.totalorder %s18, 0
      %p101 = por %p99, %p100
      %s102 = ssub.s32 %s19, %s31
      %s103 = ssub.s32 %s20, %s27
      %s104 = sor.u32 %s102, %s103
      %p105 = scmp.eq.s32.totalorder %s104, 0
      %s107 = sadd.s32 %s106, 1
      %s108 = scalar_select %p105, %s106, %s107
      %p111 = pneg %p105
      %p112 = scmp.eq.s32.totalorder %s12, 23
      %p113 = por %p111, %p112
      %p114 = scmp.ne.s32.totalorder %s106, %s109
      %p115 = scmp.eq.s32.totalorder %s12, 0
      %p116 = por %p114, %p115
      %p117 = scmp.ne.s32.totalorder %s106, %s109
      %p118 = scmp.eq.s32.totalorder %s17, 23
      %p119 = por %p117, %p118
      %p120 = scmp.ne.s32.totalorder %s109, %s110
      %p121 = scmp.eq.s32.totalorder %s17, 0
      %p122 = por %p120, %p121
      %p123 = scmp.ne.s32.totalorder %s109, %s110
      %p124 = scmp.eq.s32.totalorder %s18, 23
      %p125 = por %p123, %p124
      %p127 = scmp.ne.s32.totalorder %s110, %s126
      %p128 = scmp.eq.s32.totalorder %s18, 0
      %p129 = por %p127, %p128
      %p130 = scmp.le.s32.totalorder 1, %s12
      %p131 = scmp.lt.s32.totalorder %s12, 25
      %p132 = pnand %p130, %p131
      %p133 = pneg %p132
      // Predicated region
      $region9: #{tpu_custom_call.1} parent=5 // pred_check
        _
      $region10: #{tpu_custom_call.1} parent=5 // pred_check_branch
        %135 = sbr.rel (%p132) target = $region12
      $region11: #{tpu_custom_call.1} parent=5 // pred_region
        %s136 = ssub.s32 %s12, 1
        // Predicated region
        $region13: #{tpu_custom_call.1} parent=11 // pred_check
          %p137 = pneg %p45
        $region14: #{tpu_custom_call.1} parent=11 // pred_check_branch
          %139 = sbr.rel (%p137) target = $region16
        $region15: #{tpu_custom_call.1} parent=11 // pred_region
          _
        $region16: #{tpu_custom_call.1} parent=11 // pred_fallthru
          _
        // Predicated region
        $region17: #{tpu_custom_call.1} parent=11 // pred_check
          %p140 = pneg %p94
        $region18: #{tpu_custom_call.1} parent=11 // pred_check_branch
          %142 = sbr.rel (%p140) target = $region20
        $region19: #{tpu_custom_call.1} parent=11 // pred_region
          _
        $region20: #{tpu_custom_call.1} parent=11 // pred_fallthru
          _
      $region12: #{tpu_custom_call.1} parent=5 // pred_fallthru
        _
      %p143 = scmp.lt.s32.totalorder %s12, 24
      // Predicated region
      $region21: #{tpu_custom_call.1} parent=5 // pred_check
        %p144 = pneg %p143
      $region22: #{tpu_custom_call.1} parent=5 // pred_check_branch
        %146 = sbr.rel (%p144) target = $region24
      $region23: #{tpu_custom_call.1} parent=5 // pred_region
        // Predicated region
        $region25: #{tpu_custom_call.1} parent=23 // pred_check
          %p147 = pneg %p67
        $region26: #{tpu_custom_call.1} parent=23 // pred_check_branch
          %149 = sbr.rel (%p147) target = $region28
        $region27: #{tpu_custom_call.1} parent=23 // pred_region
          %s150 = sand.u32 %s57, 1
          %s151 = sand.u32 %s57, 1
          %s152 = smul.addr %s151, 688
          %s153 = scalar_lea.vmem [#allocation2], %s152
          %s154 = smul.u32 4, %s20
          %s155 = ssub.s32 46, %s154
          %p156 = scmp.lt.s32.totalorder %s155, 4
          %s157 = scalar_select %p156, %s155, 4
          %s158 = smul.u32 172, %s157
          %p159 = scmp.ne.s32.totalorder 0, %s158
          %s160 = smul.addr %s19, 1978
          %s161 = sadd.s32 %s154, %s160
          %s162 = smul.addr %s161, 4
          %s163 = scalar_lea.vmem %s1, %s162
          %s164 = smul.u32 %s157, 4
          // Predicated region
          $region29: #{tpu_custom_call.1} parent=27 // pred_check
            %p165 = pneg %p159
          $region30: #{tpu_custom_call.1} parent=27 // pred_check_branch
            %167 = sbr.rel (%p165) target = $region32
          $region31: #{tpu_custom_call.1} parent=27 // pred_region
            %p168 = scmp.lt.u32.totalorder %s164, 8
            %p169 = pneg %p168
            // Predicated region
            $region33: #{tpu_custom_call.1} parent=31 // pred_check
              _
            $region34: #{tpu_custom_call.1} parent=31 // pred_check_branch
              %171 = sbr.rel (%p168) target = $region36
            $region35: #{tpu_custom_call.1} parent=31 // pred_region
              %s271 = sand.u32 %s164, 7
              %p272 = scmp.eq.s32.totalorder %s271, 0
              // Predicated region
              $region48: #{tpu_custom_call.1} parent=35 // pred_check
                %p273 = pneg %p272
              $region49: #{tpu_custom_call.1} parent=35 // pred_check_branch
                %275 = sbr.rel (%p273) target = $region51
              $region50: #{tpu_custom_call.1} parent=35 // pred_region
                %s276 = sshrl.u32 %s164, 3
                // While loop
                $region52: #{tpu_custom_call.1} parent=50 // loop_pre_header
                  _
                $region53: #{tpu_custom_call.1} parent=50 // loop_header
                  %s278 = sphi 0, %s280
                  %p279 = scmp.ge.s32.totalorder %s278, %s276
                  %s283 = sphi 0, %s374
                  %s284 = sphi %s163, %s377
                  %s285 = sphi %s153, %s378
                $region54: #{tpu_custom_call.1} parent=50 // loop_header_branch
                  %282 = sbr.rel (%p279) target = $region58
                $region55: #{tpu_custom_call.1} parent=50 // loop_body
                  %v286 = vld [vmem:[%s284] sm:$0xff]
                  %287 = vst [vmem:[%s285] sm:$0xff] %v286
                  %v288 = vld [vmem:[%s284 + $0xb8] sm:$0xff]
                  %289 = vst [vmem:[%s285 + $0x10] sm:$0xff] %v288
                  %v290 = vld [vmem:[%s284 + $0x170] sm:$0xff]
                  %291 = vst [vmem:[%s285 + $0x20] sm:$0xff] %v290
                  %v292 = vld [vmem:[%s284 + $0x228] sm:$0xff]
                  %293 = vst [vmem:[%s285 + $0x30] sm:$0xff] %v292
                  %v294 = vld [vmem:[%s284 + $0x2e0] sm:$0xff]
                  %295 = vst [vmem:[%s285 + $0x40] sm:$0xff] %v294
                  %v296 = vld [vmem:[%s284 + $0x398] sm:$0xff]
                  %297 = vst [vmem:[%s285 + $0x50] sm:$0xff] %v296
                  %v298 = vld [vmem:[%s284 + $0x450] sm:$0xff]
                  %299 = vst [vmem:[%s285 + $0x60] sm:$0xff] %v298
                  %v300 = vld [vmem:[%s284 + $0x508] sm:$0xff]
                  %301 = vst [vmem:[%s285 + $0x70] sm:$0xff] %v300
                  %v302 = vld [vmem:[%s284 + $0x5c0] sm:$0xff]
                  %303 = vst [vmem:[%s285 + $0x80] sm:$0xff] %v302
                  %v304 = vld [vmem:[%s284 + $0x678] sm:$0xff]
                  %305 = vst [vmem:[%s285 + $0x90] sm:$0xff] %v304
                  %v306 = vld [vmem:[%s284 + $0x730] sm:$0xff]
                  %307 = vst [vmem:[%s285 + $0xa0] sm:$0xff] %v306
                  %v308 = vld [vmem:[%s284 + $0x7e8] sm:$0xff]
                  %309 = vst [vmem:[%s285 + $0xb0] sm:$0xff] %v308
                  %v310 = vld [vmem:[%s284 + $0x8a0] sm:$0xff]
                  %311 = vst [vmem:[%s285 + $0xc0] sm:$0xff] %v310
                  %v312 = vld [vmem:[%s284 + $0x958] sm:$0xff]
                  %313 = vst [vmem:[%s285 + $0xd0] sm:$0xff] %v312
                  %v314 = vld [vmem:[%s284 + $0xa10] sm:$0xff]
                  %315 = vst [vmem:[%s285 + $0xe0] sm:$0xff] %v314
                  %v316 = vld [vmem:[%s284 + $0xac8] sm:$0xff]
                  %317 = vst [vmem:[%s285 + $0xf0] sm:$0xff] %v316
                  %v318 = vld [vmem:[%s284 + $0xb80] sm:$0xff]
                  %319 = vst [vmem:[%s285 + $0x100] sm:$0xff] %v318
                  %v320 = vld [vmem:[%s284 + $0xc38] sm:$0xff]
                  %321 = vst [vmem:[%s285 + $0x110] sm:$0xff] %v320
                  %v322 = vld [vmem:[%s284 + $0xcf0] sm:$0xff]
                  %323 = vst [vmem:[%s285 + $0x120] sm:$0xff] %v322
                  %v324 = vld [vmem:[%s284 + $0xda8] sm:$0xff]
                  %325 = vst [vmem:[%s285 + $0x130] sm:$0xff] %v324
                  %v326 = vld [vmem:[%s284 + $0xe60] sm:$0xff]
                  %327 = vst [vmem:[%s285 + $0x140] sm:$0xff] %v326
                  %v328 = vld [vmem:[%s284 + $0xf18] sm:$0xff]
                  %329 = vst [vmem:[%s285 + $0x150] sm:$0xff] %v328
                  %v330 = vld [vmem:[%s284 + $0xfd0] sm:$0xff]
                  %331 = vst [vmem:[%s285 + $0x160] sm:$0xff] %v330
                  %v332 = vld [vmem:[%s284 + $0x1088] sm:$0xff]
                  %333 = vst [vmem:[%s285 + $0x170] sm:$0xff] %v332
                  %v334 = vld [vmem:[%s284 + $0x1140] sm:$0xff]
                  %335 = vst [vmem:[%s285 + $0x180] sm:$0xff] %v334
                  %v336 = vld [vmem:[%s284 + $0x11f8] sm:$0xff]
                  %337 = vst [vmem:[%s285 + $0x190] sm:$0xff] %v336
                  %v338 = vld [vmem:[%s284 + $0x12b0] sm:$0xff]
                  %339 = vst [vmem:[%s285 + $0x1a0] sm:$0xff] %v338
                  %v340 = vld [vmem:[%s284 + $0x1368] sm:$0xff]
                  %341 = vst [vmem:[%s285 + $0x1b0] sm:$0xff] %v340
                  %v342 = vld [vmem:[%s284 + $0x1420] sm:$0xff]
                  %343 = vst [vmem:[%s285 + $0x1c0] sm:$0xff] %v342
                  %v344 = vld [vmem:[%s284 + $0x14d8] sm:$0xff]
                  %345 = vst [vmem:[%s285 + $0x1d0] sm:$0xff] %v344
                  %v346 = vld [vmem:[%s284 + $0x1590] sm:$0xff]
                  %347 = vst [vmem:[%s285 + $0x1e0] sm:$0xff] %v346
                  %v348 = vld [vmem:[%s284 + $0x1648] sm:$0xff]
                  %349 = vst [vmem:[%s285 + $0x1f0] sm:$0xff] %v348
                  %v350 = vld [vmem:[%s284 + $0x1700] sm:$0xff]
                  %351 = vst [vmem:[%s285 + $0x200] sm:$0xff] %v350
                  %v352 = vld [vmem:[%s284 + $0x17b8] sm:$0xff]
                  %353 = vst [vmem:[%s285 + $0x210] sm:$0xff] %v352
                  %v354 = vld [vmem:[%s284 + $0x1870] sm:$0xff]
                  %355 = vst [vmem:[%s285 + $0x220] sm:$0xff] %v354
                  %v356 = vld [vmem:[%s284 + $0x1928] sm:$0xff]
                  %357 = vst [vmem:[%s285 + $0x230] sm:$0xff] %v356
                  %v358 = vld [vmem:[%s284 + $0x19e0] sm:$0xff]
                  %359 = vst [vmem:[%s285 + $0x240] sm:$0xff] %v358
                  %v360 = vld [vmem:[%s284 + $0x1a98] sm:$0xff]
                  %361 = vst [vmem:[%s285 + $0x250] sm:$0xff] %v360
                  %v362 = vld [vmem:[%s284 + $0x1b50] sm:$0xff]
                  %363 = vst [vmem:[%s285 + $0x260] sm:$0xff] %v362
                  %v364 = vld [vmem:[%s284 + $0x1c08] sm:$0xff]
                  %365 = vst [vmem:[%s285 + $0x270] sm:$0xff] %v364
                  %v366 = vld [vmem:[%s284 + $0x1cc0] sm:$0xff]
                  %367 = vst [vmem:[%s285 + $0x280] sm:$0xff] %v366
                  %v368 = vld [vmem:[%s284 + $0x1d78] sm:$0xff]
                  %369 = vst [vmem:[%s285 + $0x290] sm:$0xff] %v368
                  %v370 = vld [vmem:[%s284 + $0x1e30] sm:$0xff]
                  %371 = vst [vmem:[%s285 + $0x2a0] sm:$0xff] %v370
                  %s372 = sadd.s32 1, %s283
                  %p373 = scmp.ge.s32.totalorder %s372, %s276
                  %s374 = scalar_select %p373, 0, %s372
                  %s375 = smul.u32 %s374, 8
                  %s376 = smul.u32 %s374, 8
                  %s377 = scalar_lea.vmem %s163, %s375
                  %s378 = scalar_lea.vmem %s153, %s376 [#allocation2]
                $region56: #{tpu_custom_call.1} parent=50 // loop_footer
                  %s280 = sadd.s32 %s278, 1
                $region57: #{tpu_custom_call.1} parent=50 // loop_footer_branch
                  %277 = sbr.rel target = $region53
                $region58: #{tpu_custom_call.1} parent=50 // loop_exit
                  _
              $region51: #{tpu_custom_call.1} parent=35 // pred_fallthru
                _
              %p379 = pneg %p272
              // Predicated region
              $region59: #{tpu_custom_call.1} parent=35 // pred_check
                _
              $region60: #{tpu_custom_call.1} parent=35 // pred_check_branch
                %381 = sbr.rel (%p272) target = $region62
              $region61: #{tpu_custom_call.1} parent=35 // pred_region
                %s382 = sand.u32 %s164, 7
                %s383 = ssub.s32 %s164, %s382
                %s384 = scalar_lea.vmem %s163, %s383
                %s385 = ssub.s32 %s164, %s382
                %s386 = scalar_lea.vmem %s153, %s385 [#allocation2]
                %s387 = sshrl.u32 %s164, 3
                // While loop
                $region63: #{tpu_custom_call.1} parent=61 // loop_pre_header
                  _
                $region64: #{tpu_custom_call.1} parent=61 // loop_header
                  %s389 = sphi 0, %s391
                  %p390 = scmp.ge.s32.totalorder %s389, %s387
                  %s394 = sphi 0, %s485
                  %s395 = sphi %s163, %s488
                  %s396 = sphi %s153, %s489
                $region65: #{tpu_custom_call.1} parent=61 // loop_header_branch
                  %393 = sbr.rel (%p390) target = $region69
                $region66: #{tpu_custom_call.1} parent=61 // loop_body
                  %v397 = vld [vmem:[%s395] sm:$0xff]
                  %398 = vst [vmem:[%s396] sm:$0xff] %v397
                  %v399 = vld [vmem:[%s395 + $0xb8] sm:$0xff]
                  %400 = vst [vmem:[%s396 + $0x10] sm:$0xff] %v399
                  %v401 = vld [vmem:[%s395 + $0x170] sm:$0xff]
                  %402 = vst [vmem:[%s396 + $0x20] sm:$0xff] %v401
                  %v403 = vld [vmem:[%s395 + $0x228] sm:$0xff]
                  %404 = vst [vmem:[%s396 + $0x30] sm:$0xff] %v403
                  %v405 = vld [vmem:[%s395 + $0x2e0] sm:$0xff]
                  %406 = vst [vmem:[%s396 + $0x40] sm:$0xff] %v405
                  %v407 = vld [vmem:[%s395 + $0x398] sm:$0xff]
                  %408 = vst [vmem:[%s396 + $0x50] sm:$0xff] %v407
                  %v409 = vld [vmem:[%s395 + $0x450] sm:$0xff]
                  %410 = vst [vmem:[%s396 + $0x60] sm:$0xff] %v409
                  %v411 = vld [vmem:[%s395 + $0x508] sm:$0xff]
                  %412 = vst [vmem:[%s396 + $0x70] sm:$0xff] %v411
                  %v413 = vld [vmem:[%s395 + $0x5c0] sm:$0xff]
                  %414 = vst [vmem:[%s396 + $0x80] sm:$0xff] %v413
                  %v415 = vld [vmem:[%s395 + $0x678] sm:$0xff]
                  %416 = vst [vmem:[%s396 + $0x90] sm:$0xff] %v415
                  %v417 = vld [vmem:[%s395 + $0x730] sm:$0xff]
                  %418 = vst [vmem:[%s396 + $0xa0] sm:$0xff] %v417
                  %v419 = vld [vmem:[%s395 + $0x7e8] sm:$0xff]
                  %420 = vst [vmem:[%s396 + $0xb0] sm:$0xff] %v419
                  %v421 = vld [vmem:[%s395 + $0x8a0] sm:$0xff]
                  %422 = vst [vmem:[%s396 + $0xc0] sm:$0xff] %v421
                  %v423 = vld [vmem:[%s395 + $0x958] sm:$0xff]
                  %424 = vst [vmem:[%s396 + $0xd0] sm:$0xff] %v423
                  %v425 = vld [vmem:[%s395 + $0xa10] sm:$0xff]
                  %426 = vst [vmem:[%s396 + $0xe0] sm:$0xff] %v425
                  %v427 = vld [vmem:[%s395 + $0xac8] sm:$0xff]
                  %428 = vst [vmem:[%s396 + $0xf0] sm:$0xff] %v427
                  %v429 = vld [vmem:[%s395 + $0xb80] sm:$0xff]
                  %430 = vst [vmem:[%s396 + $0x100] sm:$0xff] %v429
                  %v431 = vld [vmem:[%s395 + $0xc38] sm:$0xff]
                  %432 = vst [vmem:[%s396 + $0x110] sm:$0xff] %v431
                  %v433 = vld [vmem:[%s395 + $0xcf0] sm:$0xff]
                  %434 = vst [vmem:[%s396 + $0x120] sm:$0xff] %v433
                  %v435 = vld [vmem:[%s395 + $0xda8] sm:$0xff]
                  %436 = vst [vmem:[%s396 + $0x130] sm:$0xff] %v435
                  %v437 = vld [vmem:[%s395 + $0xe60] sm:$0xff]
                  %438 = vst [vmem:[%s396 + $0x140] sm:$0xff] %v437
                  %v439 = vld [vmem:[%s395 + $0xf18] sm:$0xff]
                  %440 = vst [vmem:[%s396 + $0x150] sm:$0xff] %v439
                  %v441 = vld [vmem:[%s395 + $0xfd0] sm:$0xff]
                  %442 = vst [vmem:[%s396 + $0x160] sm:$0xff] %v441
                  %v443 = vld [vmem:[%s395 + $0x1088] sm:$0xff]
                  %444 = vst [vmem:[%s396 + $0x170] sm:$0xff] %v443
                  %v445 = vld [vmem:[%s395 + $0x1140] sm:$0xff]
                  %446 = vst [vmem:[%s396 + $0x180] sm:$0xff] %v445
                  %v447 = vld [vmem:[%s395 + $0x11f8] sm:$0xff]
                  %448 = vst [vmem:[%s396 + $0x190] sm:$0xff] %v447
                  %v449 = vld [vmem:[%s395 + $0x12b0] sm:$0xff]
                  %450 = vst [vmem:[%s396 + $0x1a0] sm:$0xff] %v449
                  %v451 = vld [vmem:[%s395 + $0x1368] sm:$0xff]
                  %452 = vst [vmem:[%s396 + $0x1b0] sm:$0xff] %v451
                  %v453 = vld [vmem:[%s395 + $0x1420] sm:$0xff]
                  %454 = vst [vmem:[%s396 + $0x1c0] sm:$0xff] %v453
                  %v455 = vld [vmem:[%s395 + $0x14d8] sm:$0xff]
                  %456 = vst [vmem:[%s396 + $0x1d0] sm:$0xff] %v455
                  %v457 = vld [vmem:[%s395 + $0x1590] sm:$0xff]
                  %458 = vst [vmem:[%s396 + $0x1e0] sm:$0xff] %v457
                  %v459 = vld [vmem:[%s395 + $0x1648] sm:$0xff]
                  %460 = vst [vmem:[%s396 + $0x1f0] sm:$0xff] %v459
                  %v461 = vld [vmem:[%s395 + $0x1700] sm:$0xff]
                  %462 = vst [vmem:[%s396 + $0x200] sm:$0xff] %v461
                  %v463 = vld [vmem:[%s395 + $0x17b8] sm:$0xff]
                  %464 = vst [vmem:[%s396 + $0x210] sm:$0xff] %v463
                  %v465 = vld [vmem:[%s395 + $0x1870] sm:$0xff]
                  %466 = vst [vmem:[%s396 + $0x220] sm:$0xff] %v465
                  %v467 = vld [vmem:[%s395 + $0x1928] sm:$0xff]
                  %468 = vst [vmem:[%s396 + $0x230] sm:$0xff] %v467
                  %v469 = vld [vmem:[%s395 + $0x19e0] sm:$0xff]
                  %470 = vst [vmem:[%s396 + $0x240] sm:$0xff] %v469
                  %v471 = vld [vmem:[%s395 + $0x1a98] sm:$0xff]
                  %472 = vst [vmem:[%s396 + $0x250] sm:$0xff] %v471
                  %v473 = vld [vmem:[%s395 + $0x1b50] sm:$0xff]
                  %474 = vst [vmem:[%s396 + $0x260] sm:$0xff] %v473
                  %v475 = vld [vmem:[%s395 + $0x1c08] sm:$0xff]
                  %476 = vst [vmem:[%s396 + $0x270] sm:$0xff] %v475
                  %v477 = vld [vmem:[%s395 + $0x1cc0] sm:$0xff]
                  %478 = vst [vmem:[%s396 + $0x280] sm:$0xff] %v477
                  %v479 = vld [vmem:[%s395 + $0x1d78] sm:$0xff]
                  %480 = vst [vmem:[%s396 + $0x290] sm:$0xff] %v479
                  %v481 = vld [vmem:[%s395 + $0x1e30] sm:$0xff]
                  %482 = vst [vmem:[%s396 + $0x2a0] sm:$0xff] %v481
                  %s483 = sadd.s32 1, %s394
                  %p484 = scmp.ge.s32.totalorder %s483, %s387
                  %s485 = scalar_select %p484, 0, %s483
                  %s486 = smul.u32 %s485, 8
                  %s487 = smul.u32 %s485, 8
                  %s488 = scalar_lea.vmem %s163, %s486
                  %s489 = scalar_lea.vmem %s153, %s487 [#allocation2]
                $region67: #{tpu_custom_call.1} parent=61 // loop_footer
                  %s391 = sadd.s32 %s389, 1
                $region68: #{tpu_custom_call.1} parent=61 // loop_footer_branch
                  %388 = sbr.rel target = $region64
                $region69: #{tpu_custom_call.1} parent=61 // loop_exit
                  _
                %s490 = sshll.u32 1, %s382
                %s491 = ssub.s32 %s490, 1
                loop: start=0, step=1, limit=1
                $region70: #{tpu_custom_call.1} parent=61 // loop_pre_header
                  _
                $region71: #{tpu_custom_call.1} parent=61 // loop_header
                  %s493 = sphi 0, %s497
                  %p494 = scmp.ge.s32.totalorder %s493, 1
                  %s498 = sphi %s384, %s384
                  %s499 = sphi %s386, %s386
                $region72: #{tpu_custom_call.1} parent=61 // loop_header_branch
                  %496 = sbr.rel (%p494) target = $region76
                $region73: #{tpu_custom_call.1} parent=61 // loop_body
                  %v500 = vld [vmem:[%s498] sm:%s491]
                  %501 = vst [vmem:[%s499] sm:%s491] %v500
                  %v502 = vld [vmem:[%s498 + $0xb8] sm:%s491]
                  %503 = vst [vmem:[%s499 + $0x10] sm:%s491] %v502
                  %v504 = vld [vmem:[%s498 + $0x170] sm:%s491]
                  %505 = vst [vmem:[%s499 + $0x20] sm:%s491] %v504
                  %v506 = vld [vmem:[%s498 + $0x228] sm:%s491]
                  %507 = vst [vmem:[%s499 + $0x30] sm:%s491] %v506
                  %v508 = vld [vmem:[%s498 + $0x2e0] sm:%s491]
                  %509 = vst [vmem:[%s499 + $0x40] sm:%s491] %v508
                  %v510 = vld [vmem:[%s498 + $0x398] sm:%s491]
                  %511 = vst [vmem:[%s499 + $0x50] sm:%s491] %v510
                  %v512 = vld [vmem:[%s498 + $0x450] sm:%s491]
                  %513 = vst [vmem:[%s499 + $0x60] sm:%s491] %v512
                  %v514 = vld [vmem:[%s498 + $0x508] sm:%s491]
                  %515 = vst [vmem:[%s499 + $0x70] sm:%s491] %v514
                  %v516 = vld [vmem:[%s498 + $0x5c0] sm:%s491]
                  %517 = vst [vmem:[%s499 + $0x80] sm:%s491] %v516
                  %v518 = vld [vmem:[%s498 + $0x678] sm:%s491]
                  %519 = vst [vmem:[%s499 + $0x90] sm:%s491] %v518
                  %v520 = vld [vmem:[%s498 + $0x730] sm:%s491]
                  %521 = vst [vmem:[%s499 + $0xa0] sm:%s491] %v520
                  %v522 = vld [vmem:[%s498 + $0x7e8] sm:%s491]
                  %523 = vst [vmem:[%s499 + $0xb0] sm:%s491] %v522
                  %v524 = vld [vmem:[%s498 + $0x8a0] sm:%s491]
                  %525 = vst [vmem:[%s499 + $0xc0] sm:%s491] %v524
                  %v526 = vld [vmem:[%s498 + $0x958] sm:%s491]
                  %527 = vst [vmem:[%s499 + $0xd0] sm:%s491] %v526
                  %v528 = vld [vmem:[%s498 + $0xa10] sm:%s491]
                  %529 = vst [vmem:[%s499 + $0xe0] sm:%s491] %v528
                  %v530 = vld [vmem:[%s498 + $0xac8] sm:%s491]
                  %531 = vst [vmem:[%s499 + $0xf0] sm:%s491] %v530
                  %v532 = vld [vmem:[%s498 + $0xb80] sm:%s491]
                  %533 = vst [vmem:[%s499 + $0x100] sm:%s491] %v532
                  %v534 = vld [vmem:[%s498 + $0xc38] sm:%s491]
                  %535 = vst [vmem:[%s499 + $0x110] sm:%s491] %v534
                  %v536 = vld [vmem:[%s498 + $0xcf0] sm:%s491]
                  %537 = vst [vmem:[%s499 + $0x120] sm:%s491] %v536
                  %v538 = vld [vmem:[%s498 + $0xda8] sm:%s491]
                  %539 = vst [vmem:[%s499 + $0x130] sm:%s491] %v538
                  %v540 = vld [vmem:[%s498 + $0xe60] sm:%s491]
                  %541 = vst [vmem:[%s499 + $0x140] sm:%s491] %v540
                  %v542 = vld [vmem:[%s498 + $0xf18] sm:%s491]
                  %543 = vst [vmem:[%s499 + $0x150] sm:%s491] %v542
                  %v544 = vld [vmem:[%s498 + $0xfd0] sm:%s491]
                  %545 = vst [vmem:[%s499 + $0x160] sm:%s491] %v544
                  %v546 = vld [vmem:[%s498 + $0x1088] sm:%s491]
                  %547 = vst [vmem:[%s499 + $0x170] sm:%s491] %v546
                  %v548 = vld [vmem:[%s498 + $0x1140] sm:%s491]
                  %549 = vst [vmem:[%s499 + $0x180] sm:%s491] %v548
                  %v550 = vld [vmem:[%s498 + $0x11f8] sm:%s491]
                  %551 = vst [vmem:[%s499 + $0x190] sm:%s491] %v550
                  %v552 = vld [vmem:[%s498 + $0x12b0] sm:%s491]
                  %553 = vst [vmem:[%s499 + $0x1a0] sm:%s491] %v552
                  %v554 = vld [vmem:[%s498 + $0x1368] sm:%s491]
                  %555 = vst [vmem:[%s499 + $0x1b0] sm:%s491] %v554
                  %v556 = vld [vmem:[%s498 + $0x1420] sm:%s491]
                  %557 = vst [vmem:[%s499 + $0x1c0] sm:%s491] %v556
                  %v558 = vld [vmem:[%s498 + $0x14d8] sm:%s491]
                  %559 = vst [vmem:[%s499 + $0x1d0] sm:%s491] %v558
                  %v560 = vld [vmem:[%s498 + $0x1590] sm:%s491]
                  %561 = vst [vmem:[%s499 + $0x1e0] sm:%s491] %v560
                  %v562 = vld [vmem:[%s498 + $0x1648] sm:%s491]
                  %563 = vst [vmem:[%s499 + $0x1f0] sm:%s491] %v562
                  %v564 = vld [vmem:[%s498 + $0x1700] sm:%s491]
                  %565 = vst [vmem:[%s499 + $0x200] sm:%s491] %v564
                  %v566 = vld [vmem:[%s498 + $0x17b8] sm:%s491]
                  %567 = vst [vmem:[%s499 + $0x210] sm:%s491] %v566
                  %v568 = vld [vmem:[%s498 + $0x1870] sm:%s491]
                  %569 = vst [vmem:[%s499 + $0x220] sm:%s491] %v568
                  %v570 = vld [vmem:[%s498 + $0x1928] sm:%s491]
                  %571 = vst [vmem:[%s499 + $0x230] sm:%s491] %v570
                  %v572 = vld [vmem:[%s498 + $0x19e0] sm:%s491]
                  %573 = vst [vmem:[%s499 + $0x240] sm:%s491] %v572
                  %v574 = vld [vmem:[%s498 + $0x1a98] sm:%s491]
                  %575 = vst [vmem:[%s499 + $0x250] sm:%s491] %v574
                  %v576 = vld [vmem:[%s498 + $0x1b50] sm:%s491]
                  %577 = vst [vmem:[%s499 + $0x260] sm:%s491] %v576
                  %v578 = vld [vmem:[%s498 + $0x1c08] sm:%s491]
                  %579 = vst [vmem:[%s499 + $0x270] sm:%s491] %v578
                  %v580 = vld [vmem:[%s498 + $0x1cc0] sm:%s491]
                  %581 = vst [vmem:[%s499 + $0x280] sm:%s491] %v580
                  %v582 = vld [vmem:[%s498 + $0x1d78] sm:%s491]
                  %583 = vst [vmem:[%s499 + $0x290] sm:%s491] %v582
                  %v584 = vld [vmem:[%s498 + $0x1e30] sm:%s491]
                  %585 = vst [vmem:[%s499 + $0x2a0] sm:%s491] %v584
                $region74: #{tpu_custom_call.1} parent=61 // loop_footer
                  %s497 = sadd.s32 1, %s493
                $region75: #{tpu_custom_call.1} parent=61 // loop_footer_branch
                  %492 = sbr.rel target = $region71
                $region76: #{tpu_custom_call.1} parent=61 // loop_exit
                  _
              $region62: #{tpu_custom_call.1} parent=35 // pred_fallthru
                _
            $region36: #{tpu_custom_call.1} parent=31 // pred_fallthru
              _
            // Predicated region
            $region37: #{tpu_custom_call.1} parent=31 // pred_check
              %p172 = pneg %p168
            $region38: #{tpu_custom_call.1} parent=31 // pred_check_branch
              %174 = sbr.rel (%p172) target = $region40
            $region39: #{tpu_custom_call.1} parent=31 // pred_region
              %s175 = sshll.u32 1, %s164
              %s176 = ssub.s32 %s175, 1
              loop: start=0, step=1, limit=1
              $region41: #{tpu_custom_call.1} parent=39 // loop_pre_header
                _
              $region42: #{tpu_custom_call.1} parent=39 // loop_header
                %s178 = sphi 0, %s182
                %p179 = scmp.ge.s32.totalorder %s178, 1
                %s183 = sphi %s163, %s163
                %s184 = sphi %s153, %s153
              $region43: #{tpu_custom_call.1} parent=39 // loop_header_branch
                %181 = sbr.rel (%p179) target = $region47
              $region44: #{tpu_custom_call.1} parent=39 // loop_body
                %v185 = vld [vmem:[%s183] sm:%s176]
                %186 = vst [vmem:[%s184] sm:%s176] %v185
                %v187 = vld [vmem:[%s183 + $0xb8] sm:%s176]
                %188 = vst [vmem:[%s184 + $0x10] sm:%s176] %v187
                %v189 = vld [vmem:[%s183 + $0x170] sm:%s176]
                %190 = vst [vmem:[%s184 + $0x20] sm:%s176] %v189
                %v191 = vld [vmem:[%s183 + $0x228] sm:%s176]
                %192 = vst [vmem:[%s184 + $0x30] sm:%s176] %v191
                %v193 = vld [vmem:[%s183 + $0x2e0] sm:%s176]
                %194 = vst [vmem:[%s184 + $0x40] sm:%s176] %v193
                %v195 = vld [vmem:[%s183 + $0x398] sm:%s176]
                %196 = vst [vmem:[%s184 + $0x50] sm:%s176] %v195
                %v197 = vld [vmem:[%s183 + $0x450] sm:%s176]
                %198 = vst [vmem:[%s184 + $0x60] sm:%s176] %v197
                %v199 = vld [vmem:[%s183 + $0x508] sm:%s176]
                %200 = vst [vmem:[%s184 + $0x70] sm:%s176] %v199
                %v201 = vld [vmem:[%s183 + $0x5c0] sm:%s176]
                %202 = vst [vmem:[%s184 + $0x80] sm:%s176] %v201
                %v203 = vld [vmem:[%s183 + $0x678] sm:%s176]
                %204 = vst [vmem:[%s184 + $0x90] sm:%s176] %v203
                %v205 = vld [vmem:[%s183 + $0x730] sm:%s176]
                %206 = vst [vmem:[%s184 + $0xa0] sm:%s176] %v205
                %v207 = vld [vmem:[%s183 + $0x7e8] sm:%s176]
                %208 = vst [vmem:[%s184 + $0xb0] sm:%s176] %v207
                %v209 = vld [vmem:[%s183 + $0x8a0] sm:%s176]
                %210 = vst [vmem:[%s184 + $0xc0] sm:%s176] %v209
                %v211 = vld [vmem:[%s183 + $0x958] sm:%s176]
                %212 = vst [vmem:[%s184 + $0xd0] sm:%s176] %v211
                %v213 = vld [vmem:[%s183 + $0xa10] sm:%s176]
                %214 = vst [vmem:[%s184 + $0xe0] sm:%s176] %v213
                %v215 = vld [vmem:[%s183 + $0xac8] sm:%s176]
                %216 = vst [vmem:[%s184 + $0xf0] sm:%s176] %v215
                %v217 = vld [vmem:[%s183 + $0xb80] sm:%s176]
                %218 = vst [vmem:[%s184 + $0x100] sm:%s176] %v217
                %v219 = vld [vmem:[%s183 + $0xc38] sm:%s176]
                %220 = vst [vmem:[%s184 + $0x110] sm:%s176] %v219
                %v221 = vld [vmem:[%s183 + $0xcf0] sm:%s176]
                %222 = vst [vmem:[%s184 + $0x120] sm:%s176] %v221
                %v223 = vld [vmem:[%s183 + $0xda8] sm:%s176]
                %224 = vst [vmem:[%s184 + $0x130] sm:%s176] %v223
                %v225 = vld [vmem:[%s183 + $0xe60] sm:%s176]
                %226 = vst [vmem:[%s184 + $0x140] sm:%s176] %v225
                %v227 = vld [vmem:[%s183 + $0xf18] sm:%s176]
                %228 = vst [vmem:[%s184 + $0x150] sm:%s176] %v227
                %v229 = vld [vmem:[%s183 + $0xfd0] sm:%s176]
                %230 = vst [vmem:[%s184 + $0x160] sm:%s176] %v229
                %v231 = vld [vmem:[%s183 + $0x1088] sm:%s176]
                %232 = vst [vmem:[%s184 + $0x170] sm:%s176] %v231
                %v233 = vld [vmem:[%s183 + $0x1140] sm:%s176]
                %234 = vst [vmem:[%s184 + $0x180] sm:%s176] %v233
                %v235 = vld [vmem:[%s183 + $0x11f8] sm:%s176]
                %236 = vst [vmem:[%s184 + $0x190] sm:%s176] %v235
                %v237 = vld [vmem:[%s183 + $0x12b0] sm:%s176]
                %238 = vst [vmem:[%s184 + $0x1a0] sm:%s176] %v237
                %v239 = vld [vmem:[%s183 + $0x1368] sm:%s176]
                %240 = vst [vmem:[%s184 + $0x1b0] sm:%s176] %v239
                %v241 = vld [vmem:[%s183 + $0x1420] sm:%s176]
                %242 = vst [vmem:[%s184 + $0x1c0] sm:%s176] %v241
                %v243 = vld [vmem:[%s183 + $0x14d8] sm:%s176]
                %244 = vst [vmem:[%s184 + $0x1d0] sm:%s176] %v243
                %v245 = vld [vmem:[%s183 + $0x1590] sm:%s176]
                %246 = vst [vmem:[%s184 + $0x1e0] sm:%s176] %v245
                %v247 = vld [vmem:[%s183 + $0x1648] sm:%s176]
                %248 = vst [vmem:[%s184 + $0x1f0] sm:%s176] %v247
                %v249 = vld [vmem:[%s183 + $0x1700] sm:%s176]
                %250 = vst [vmem:[%s184 + $0x200] sm:%s176] %v249
                %v251 = vld [vmem:[%s183 + $0x17b8] sm:%s176]
                %252 = vst [vmem:[%s184 + $0x210] sm:%s176] %v251
                %v253 = vld [vmem:[%s183 + $0x1870] sm:%s176]
                %254 = vst [vmem:[%s184 + $0x220] sm:%s176] %v253
                %v255 = vld [vmem:[%s183 + $0x1928] sm:%s176]
                %256 = vst [vmem:[%s184 + $0x230] sm:%s176] %v255
                %v257 = vld [vmem:[%s183 + $0x19e0] sm:%s176]
                %258 = vst [vmem:[%s184 + $0x240] sm:%s176] %v257
                %v259 = vld [vmem:[%s183 + $0x1a98] sm:%s176]
                %260 = vst [vmem:[%s184 + $0x250] sm:%s176] %v259
                %v261 = vld [vmem:[%s183 + $0x1b50] sm:%s176]
                %262 = vst [vmem:[%s184 + $0x260] sm:%s176] %v261
                %v263 = vld [vmem:[%s183 + $0x1c08] sm:%s176]
                %264 = vst [vmem:[%s184 + $0x270] sm:%s176] %v263
                %v265 = vld [vmem:[%s183 + $0x1cc0] sm:%s176]
                %266 = vst [vmem:[%s184 + $0x280] sm:%s176] %v265
                %v267 = vld [vmem:[%s183 + $0x1d78] sm:%s176]
                %268 = vst [vmem:[%s184 + $0x290] sm:%s176] %v267
                %v269 = vld [vmem:[%s183 + $0x1e30] sm:%s176]
                %270 = vst [vmem:[%s184 + $0x2a0] sm:%s176] %v269
              $region45: #{tpu_custom_call.1} parent=39 // loop_footer
                %s182 = sadd.s32 1, %s178
              $region46: #{tpu_custom_call.1} parent=39 // loop_footer_branch
                %177 = sbr.rel target = $region42
              $region47: #{tpu_custom_call.1} parent=39 // loop_exit
                _
            $region40: #{tpu_custom_call.1} parent=31 // pred_fallthru
              _
          $region32: #{tpu_custom_call.1} parent=27 // pred_fallthru
            _
          %586 = vnop
        $region28: #{tpu_custom_call.1} parent=23 // pred_fallthru
          _
      $region24: #{tpu_custom_call.1} parent=5 // pred_fallthru
        _
      %p587 = scmp.le.s32.totalorder 1, %s12
      %p588 = scmp.lt.s32.totalorder %s12, 25
      %p589 = pnand %p587, %p588
      %p590 = pneg %p589
      // Predicated region
      $region77: #{tpu_custom_call.1} parent=5 // pred_check
        _
      $region78: #{tpu_custom_call.1} parent=5 // pred_check_branch
        %592 = sbr.rel (%p589) target = $region80
      $region79: #{tpu_custom_call.1} parent=5 // pred_region
        %s593 = ssub.s32 %s12, 1
        %s594 = sand.u32 %s60, 1
        %s595 = sand.u32 %s60, 1
        %s596 = smul.addr %s595, 688
        %s597 = scalar_lea.vmem [#allocation2], %s596
        // Predicated region
        $region81: #{tpu_custom_call.1} parent=79 // pred_check
          %p598 = pneg %p73
        $region82: #{tpu_custom_call.1} parent=79 // pred_check_branch
          %600 = sbr.rel (%p598) target = $region84
        $region83: #{tpu_custom_call.1} parent=79 // pred_region
          _
        $region84: #{tpu_custom_call.1} parent=79 // pred_fallthru
          _
        %p601 = pneg %p45
        %p602 = pneg %p42
        %s603 = sand.u32 %s60, 1
        %s604 = sand.u32 %s60, 1
        %s605 = smul.addr %s604, 688
        %s606 = scalar_lea.vmem [#allocation2], %s605
        %p607 = pneg %p73
        %p608 = pneg %p70
        %p609 = pneg %p94
        %p610 = pneg %p91
        %p611 = pneg %p122
        %p612 = pneg %p119
        %s613 = sand.u32 %s109, 1
        %s614 = scalar_lea.sflag [#allocation4], %s613
        %s615 = sand.u32 %s109, 1
        %s616 = smul.addr %s615, 16
        %s617 = scalar_lea.vmem [#allocation3], %s616
        %s618 = smul.u32 4, %s22
        %s619 = ssub.s32 46, %s618
        %p620 = scmp.lt.s32.totalorder %s619, 4
        %s621 = scalar_select %p620, %s619, 4
        %s622 = smul.u32 172, %s621
        %s623 = smul.u32 4, %s22
        %s624 = ssub.s32 46, %s623
        %p625 = scmp.lt.s32.totalorder %s624, 4
        %s626 = scalar_select %p625, %s624, 4
        %s627 = smul.u32 4, %s626
        %v629 = vld [vmem:[%s0] sm:$0xff]
        %v630 = vld [vmem:[%s0 + $0x8] sm:$0xf]
        %v631 = vld [vmem:[%s597] sm:$0xff]
        %v632 = vld [vmem:[%s597 + $0x8] sm:$0xff]
        %v633 = vld [vmem:[%s597 + $0x10] sm:$0xff]
        %v634 = vld [vmem:[%s597 + $0x18] sm:$0xff]
        %v635 = vld [vmem:[%s597 + $0x20] sm:$0xff]
        %v636 = vld [vmem:[%s597 + $0x28] sm:$0xff]
        %v637 = vld [vmem:[%s597 + $0x30] sm:$0xff]
        %v638 = vld [vmem:[%s597 + $0x38] sm:$0xff]
        %v639 = vld [vmem:[%s597 + $0x40] sm:$0xff]
        %v640 = vld [vmem:[%s597 + $0x48] sm:$0xff]
        %v641 = vld [vmem:[%s597 + $0x50] sm:$0xff]
        %v642 = vld [vmem:[%s597 + $0x58] sm:$0xff]
        %v643 = vld [vmem:[%s597 + $0x60] sm:$0xff]
        %v644 = vld [vmem:[%s597 + $0x68] sm:$0xff]
        %v645 = vld [vmem:[%s597 + $0x70] sm:$0xff]
        %v646 = vld [vmem:[%s597 + $0x78] sm:$0xff]
        %v647 = vld [vmem:[%s597 + $0x80] sm:$0xff]
        %v648 = vld [vmem:[%s597 + $0x88] sm:$0xff]
        %v649 = vld [vmem:[%s597 + $0x90] sm:$0xff]
        %v650 = vld [vmem:[%s597 + $0x98] sm:$0xff]
        %v651 = vld [vmem:[%s597 + $0xa0] sm:$0xff]
        %v652 = vld [vmem:[%s597 + $0xa8] sm:$0xff]
        %v653 = vld [vmem:[%s597 + $0xb0] sm:$0xff]
        %v654 = vld [vmem:[%s597 + $0xb8] sm:$0xff]
        %v655 = vld [vmem:[%s597 + $0xc0] sm:$0xff]
        %v656 = vld [vmem:[%s597 + $0xc8] sm:$0xff]
        %v657 = vld [vmem:[%s597 + $0xd0] sm:$0xff]
        %v658 = vld [vmem:[%s597 + $0xd8] sm:$0xff]
        %v659 = vld [vmem:[%s597 + $0xe0] sm:$0xff]
        %v660 = vld [vmem:[%s597 + $0xe8] sm:$0xff]
        %v661 = vld [vmem:[%s597 + $0xf0] sm:$0xff]
        %v662 = vld [vmem:[%s597 + $0xf8] sm:$0xff]
        %v663 = vld [vmem:[%s597 + $0x100] sm:$0xff]
        %v664 = vld [vmem:[%s597 + $0x108] sm:$0xff]
        %v665 = vld [vmem:[%s597 + $0x110] sm:$0xff]
        %v666 = vld [vmem:[%s597 + $0x118] sm:$0xff]
        %v667 = vld [vmem:[%s597 + $0x120] sm:$0xff]
        %v668 = vld [vmem:[%s597 + $0x128] sm:$0xff]
        %v669 = vld [vmem:[%s597 + $0x130] sm:$0xff]
        %v670 = vld [vmem:[%s597 + $0x138] sm:$0xff]
        %v671 = vld [vmem:[%s597 + $0x140] sm:$0xff]
        %v672 = vld [vmem:[%s597 + $0x148] sm:$0xff]
        %v673 = vld [vmem:[%s597 + $0x150] sm:$0xff]
        %v674 = vld [vmem:[%s597 + $0x158] sm:$0xff]
        %v675 = vld [vmem:[%s597 + $0x160] sm:$0xff]
        %v676 = vld [vmem:[%s597 + $0x168] sm:$0xff]
        %v677 = vld [vmem:[%s597 + $0x170] sm:$0xff]
        %v678 = vld [vmem:[%s597 + $0x178] sm:$0xff]
        %v679 = vld [vmem:[%s597 + $0x180] sm:$0xff]
        %v680 = vld [vmem:[%s597 + $0x188] sm:$0xff]
        %v681 = vld [vmem:[%s597 + $0x190] sm:$0xff]
        %v682 = vld [vmem:[%s597 + $0x198] sm:$0xff]
        %v683 = vld [vmem:[%s597 + $0x1a0] sm:$0xff]
        %v684 = vld [vmem:[%s597 + $0x1a8] sm:$0xff]
        %v685 = vld [vmem:[%s597 + $0x1b0] sm:$0xff]
        %v686 = vld [vmem:[%s597 + $0x1b8] sm:$0xff]
        %v687 = vld [vmem:[%s597 + $0x1c0] sm:$0xff]
        %v688 = vld [vmem:[%s597 + $0x1c8] sm:$0xff]
        %v689 = vld [vmem:[%s597 + $0x1d0] sm:$0xff]
        %v690 = vld [vmem:[%s597 + $0x1d8] sm:$0xff]
        %v691 = vld [vmem:[%s597 + $0x1e0] sm:$0xff]
        %v692 = vld [vmem:[%s597 + $0x1e8] sm:$0xff]
        %v693 = vld [vmem:[%s597 + $0x1f0] sm:$0xff]
        %v694 = vld [vmem:[%s597 + $0x1f8] sm:$0xff]
        %v695 = vld [vmem:[%s597 + $0x200] sm:$0xff]
        %v696 = vld [vmem:[%s597 + $0x208] sm:$0xff]
        %v697 = vld [vmem:[%s597 + $0x210] sm:$0xff]
        %v698 = vld [vmem:[%s597 + $0x218] sm:$0xff]
        %v699 = vld [vmem:[%s597 + $0x220] sm:$0xff]
        %v700 = vld [vmem:[%s597 + $0x228] sm:$0xff]
        %v701 = vld [vmem:[%s597 + $0x230] sm:$0xff]
        %v702 = vld [vmem:[%s597 + $0x238] sm:$0xff]
        %v703 = vld [vmem:[%s597 + $0x240] sm:$0xff]
        %v704 = vld [vmem:[%s597 + $0x248] sm:$0xff]
        %v705 = vld [vmem:[%s597 + $0x250] sm:$0xff]
        %v706 = vld [vmem:[%s597 + $0x258] sm:$0xff]
        %v707 = vld [vmem:[%s597 + $0x260] sm:$0xff]
        %v708 = vld [vmem:[%s597 + $0x268] sm:$0xff]
        %v709 = vld [vmem:[%s597 + $0x270] sm:$0xff]
        %v710 = vld [vmem:[%s597 + $0x278] sm:$0xff]
        %v711 = vld [vmem:[%s597 + $0x280] sm:$0xff]
        %v712 = vld [vmem:[%s597 + $0x288] sm:$0xff]
        %v713 = vld [vmem:[%s597 + $0x290] sm:$0xff]
        %v714 = vld [vmem:[%s597 + $0x298] sm:$0xff]
        %v715 = vld [vmem:[%s597 + $0x2a0] sm:$0xff]
        %v716 = vld [vmem:[%s597 + $0x2a8] sm:$0xff]
        %v717 = vld [vmem:[%s2] sm:$0xff]
        %719 = vset.pattern.permute.xlu0 0
        %720 = vperm.xlu0 %719, %v717
        %v721 = vpop.permute.xlu0 %720
        %v725 = vunpack.c.l.b16 %v629
        %v726 = vunpack.c.h.b16 %v629
        %v727 = vunpack.c.l.b16 %v630
        %v728 = vpack.c.b16 %v725, %v725
        %v729 = vpack.c.b16 %v726, %v726
        %v730 = vpack.c.b16 %v727, %v727
        %v819 = vunpack.c.l.b16 %v631
        %v820 = vunpack.c.h.b16 %v631
        %v821 = vunpack.c.l.b16 %v632
        %v822 = vunpack.c.h.b16 %v632
        %v823 = vunpack.c.l.b16 %v633
        %v824 = vunpack.c.h.b16 %v633
        %v825 = vunpack.c.l.b16 %v634
        %v826 = vunpack.c.h.b16 %v634
        %v827 = vunpack.c.l.b16 %v635
        %v828 = vunpack.c.h.b16 %v635
        %v829 = vunpack.c.l.b16 %v636
        %v830 = vunpack.c.h.b16 %v636
        %v831 = vunpack.c.l.b16 %v637
        %v832 = vunpack.c.h.b16 %v637
        %v833 = vunpack.c.l.b16 %v638
        %v834 = vunpack.c.h.b16 %v638
        %v835 = vunpack.c.l.b16 %v639
        %v836 = vunpack.c.h.b16 %v639
        %v837 = vunpack.c.l.b16 %v640
        %v838 = vunpack.c.h.b16 %v640
        %v839 = vunpack.c.l.b16 %v641
        %v840 = vunpack.c.h.b16 %v641
        %v841 = vunpack.c.l.b16 %v642
        %v842 = vunpack.c.h.b16 %v642
        %v843 = vunpack.c.l.b16 %v643
        %v844 = vunpack.c.h.b16 %v643
        %v845 = vunpack.c.l.b16 %v644
        %v846 = vunpack.c.h.b16 %v644
        %v847 = vunpack.c.l.b16 %v645
        %v848 = vunpack.c.h.b16 %v645
        %v849 = vunpack.c.l.b16 %v646
        %v850 = vunpack.c.h.b16 %v646
        %v851 = vunpack.c.l.b16 %v647
        %v852 = vunpack.c.h.b16 %v647
        %v853 = vunpack.c.l.b16 %v648
        %v854 = vunpack.c.h.b16 %v648
        %v855 = vunpack.c.l.b16 %v649
        %v856 = vunpack.c.h.b16 %v649
        %v857 = vunpack.c.l.b16 %v650
        %v858 = vunpack.c.h.b16 %v650
        %v859 = vunpack.c.l.b16 %v651
        %v860 = vunpack.c.h.b16 %v651
        %v861 = vunpack.c.l.b16 %v652
        %v862 = vunpack.c.h.b16 %v652
        %v863 = vunpack.c.l.b16 %v653
        %v864 = vunpack.c.h.b16 %v653
        %v865 = vunpack.c.l.b16 %v654
        %v866 = vunpack.c.h.b16 %v654
        %v867 = vunpack.c.l.b16 %v655
        %v868 = vunpack.c.h.b16 %v655
        %v869 = vunpack.c.l.b16 %v656
        %v870 = vunpack.c.h.b16 %v656
        %v871 = vunpack.c.l.b16 %v657
        %v872 = vunpack.c.h.b16 %v657
        %v873 = vunpack.c.l.b16 %v658
        %v874 = vunpack.c.h.b16 %v658
        %v875 = vunpack.c.l.b16 %v659
        %v876 = vunpack.c.h.b16 %v659
        %v877 = vunpack.c.l.b16 %v660
        %v878 = vunpack.c.h.b16 %v660
        %v879 = vunpack.c.l.b16 %v661
        %v880 = vunpack.c.h.b16 %v661
        %v881 = vunpack.c.l.b16 %v662
        %v882 = vunpack.c.h.b16 %v662
        %v883 = vunpack.c.l.b16 %v663
        %v884 = vunpack.c.h.b16 %v663
        %v885 = vunpack.c.l.b16 %v664
        %v886 = vunpack.c.h.b16 %v664
        %v887 = vunpack.c.l.b16 %v665
        %v888 = vunpack.c.h.b16 %v665
        %v889 = vunpack.c.l.b16 %v666
        %v890 = vunpack.c.h.b16 %v666
        %v891 = vunpack.c.l.b16 %v667
        %v892 = vunpack.c.h.b16 %v667
        %v893 = vunpack.c.l.b16 %v668
        %v894 = vunpack.c.h.b16 %v668
        %v895 = vunpack.c.l.b16 %v669
        %v896 = vunpack.c.h.b16 %v669
        %v897 = vunpack.c.l.b16 %v670
        %v898 = vunpack.c.h.b16 %v670
        %v899 = vunpack.c.l.b16 %v671
        %v900 = vunpack.c.h.b16 %v671
        %v901 = vunpack.c.l.b16 %v672
        %v902 = vunpack.c.h.b16 %v672
        %v903 = vunpack.c.l.b16 %v673
        %v904 = vunpack.c.h.b16 %v673
        %v905 = vunpack.c.l.b16 %v674
        %v906 = vunpack.c.h.b16 %v674
        %v907 = vunpack.c.l.b16 %v675
        %v908 = vunpack.c.h.b16 %v675
        %v909 = vunpack.c.l.b16 %v676
        %v910 = vunpack.c.h.b16 %v676
        %v911 = vunpack.c.l.b16 %v677
        %v912 = vunpack.c.h.b16 %v677
        %v913 = vunpack.c.l.b16 %v678
        %v914 = vunpack.c.h.b16 %v678
        %v915 = vunpack.c.l.b16 %v679
        %v916 = vunpack.c.h.b16 %v679
        %v917 = vunpack.c.l.b16 %v680
        %v918 = vunpack.c.h.b16 %v680
        %v919 = vunpack.c.l.b16 %v681
        %v920 = vunpack.c.h.b16 %v681
        %v921 = vunpack.c.l.b16 %v682
        %v922 = vunpack.c.h.b16 %v682
        %v923 = vunpack.c.l.b16 %v683
        %v924 = vunpack.c.h.b16 %v683
        %v925 = vunpack.c.l.b16 %v684
        %v926 = vunpack.c.h.b16 %v684
        %v927 = vunpack.c.l.b16 %v685
        %v928 = vunpack.c.h.b16 %v685
        %v929 = vunpack.c.l.b16 %v686
        %v930 = vunpack.c.h.b16 %v686
        %v931 = vunpack.c.l.b16 %v687
        %v932 = vunpack.c.h.b16 %v687
        %v933 = vunpack.c.l.b16 %v688
        %v934 = vunpack.c.h.b16 %v688
        %v935 = vunpack.c.l.b16 %v689
        %v936 = vunpack.c.h.b16 %v689
        %v937 = vunpack.c.l.b16 %v690
        %v938 = vunpack.c.h.b16 %v690
        %v939 = vunpack.c.l.b16 %v691
        %v940 = vunpack.c.h.b16 %v691
        %v941 = vunpack.c.l.b16 %v692
        %v942 = vunpack.c.h.b16 %v692
        %v943 = vunpack.c.l.b16 %v693
        %v944 = vunpack.c.h.b16 %v693
        %v945 = vunpack.c.l.b16 %v694
        %v946 = vunpack.c.h.b16 %v694
        %v947 = vunpack.c.l.b16 %v695
        %v948 = vunpack.c.h.b16 %v695
        %v949 = vunpack.c.l.b16 %v696
        %v950 = vunpack.c.h.b16 %v696
        %v951 = vunpack.c.l.b16 %v697
        %v952 = vunpack.c.h.b16 %v697
        %v953 = vunpack.c.l.b16 %v698
        %v954 = vunpack.c.h.b16 %v698
        %v955 = vunpack.c.l.b16 %v699
        %v956 = vunpack.c.h.b16 %v699
        %v957 = vunpack.c.l.b16 %v700
        %v958 = vunpack.c.h.b16 %v700
        %v959 = vunpack.c.l.b16 %v701
        %v960 = vunpack.c.h.b16 %v701
        %v961 = vunpack.c.l.b16 %v702
        %v962 = vunpack.c.h.b16 %v702
        %v963 = vunpack.c.l.b16 %v703
        %v964 = vunpack.c.h.b16 %v703
        %v965 = vunpack.c.l.b16 %v704
        %v966 = vunpack.c.h.b16 %v704
        %v967 = vunpack.c.l.b16 %v705
        %v968 = vunpack.c.h.b16 %v705
        %v969 = vunpack.c.l.b16 %v706
        %v970 = vunpack.c.h.b16 %v706
        %v971 = vunpack.c.l.b16 %v707
        %v972 = vunpack.c.h.b16 %v707
        %v973 = vunpack.c.l.b16 %v708
        %v974 = vunpack.c.h.b16 %v708
        %v975 = vunpack.c.l.b16 %v709
        %v976 = vunpack.c.h.b16 %v709
        %v977 = vunpack.c.l.b16 %v710
        %v978 = vunpack.c.h.b16 %v710
        %v979 = vunpack.c.l.b16 %v711
        %v980 = vunpack.c.h.b16 %v711
        %v981 = vunpack.c.l.b16 %v712
        %v982 = vunpack.c.h.b16 %v712
        %v983 = vunpack.c.l.b16 %v713
        %v984 = vunpack.c.h.b16 %v713
        %v985 = vunpack.c.l.b16 %v714
        %v986 = vunpack.c.h.b16 %v714
        %v987 = vunpack.c.l.b16 %v715
        %v988 = vunpack.c.h.b16 %v715
        %v989 = vunpack.c.l.b16 %v716
        %v990 = vunpack.c.h.b16 %v716
        %v991 = vpack.c.b16 %v823, %v819
        %v992 = vpack.c.b16 %v824, %v820
        %v993 = vpack.c.b16 %v825, %v821
        %v994 = vpack.c.b16 %v826, %v822
        %v995 = vpack.c.b16 %v831, %v827
        %v996 = vpack.c.b16 %v832, %v828
        %v997 = vpack.c.b16 %v833, %v829
        %v998 = vpack.c.b16 %v834, %v830
        %v999 = vpack.c.b16 %v839, %v835
        %v1000 = vpack.c.b16 %v840, %v836
        %v1001 = vpack.c.b16 %v841, %v837
        %v1002 = vpack.c.b16 %v842, %v838
        %v1003 = vpack.c.b16 %v847, %v843
        %v1004 = vpack.c.b16 %v848, %v844
        %v1005 = vpack.c.b16 %v849, %v845
        %v1006 = vpack.c.b16 %v850, %v846
        %v1007 = vpack.c.b16 %v855, %v851
        %v1008 = vpack.c.b16 %v856, %v852
        %v1009 = vpack.c.b16 %v857, %v853
        %v1010 = vpack.c.b16 %v858, %v854
        %v1011 = vpack.c.b16 %v863, %v859
        %v1012 = vpack.c.b16 %v864, %v860
        %v1013 = vpack.c.b16 %v865, %v861
        %v1014 = vpack.c.b16 %v866, %v862
        %v1015 = vpack.c.b16 %v871, %v867
        %v1016 = vpack.c.b16 %v872, %v868
        %v1017 = vpack.c.b16 %v873, %v869
        %v1018 = vpack.c.b16 %v874, %v870
        %v1019 = vpack.c.b16 %v879, %v875
        %v1020 = vpack.c.b16 %v880, %v876
        %v1021 = vpack.c.b16 %v881, %v877
        %v1022 = vpack.c.b16 %v882, %v878
        %v1023 = vpack.c.b16 %v887, %v883
        %v1024 = vpack.c.b16 %v888, %v884
        %v1025 = vpack.c.b16 %v889, %v885
        %v1026 = vpack.c.b16 %v890, %v886
        %v1027 = vpack.c.b16 %v895, %v891
        %v1028 = vpack.c.b16 %v896, %v892
        %v1029 = vpack.c.b16 %v897, %v893
        %v1030 = vpack.c.b16 %v898, %v894
        %v1031 = vpack.c.b16 %v903, %v899
        %v1032 = vpack.c.b16 %v904, %v900
        %v1033 = vpack.c.b16 %v905, %v901
        %v1034 = vpack.c.b16 %v906, %v902
        %v1035 = vpack.c.b16 %v911, %v907
        %v1036 = vpack.c.b16 %v912, %v908
        %v1037 = vpack.c.b16 %v913, %v909
        %v1038 = vpack.c.b16 %v914, %v910
        %v1039 = vpack.c.b16 %v919, %v915
        %v1040 = vpack.c.b16 %v920, %v916
        %v1041 = vpack.c.b16 %v921, %v917
        %v1042 = vpack.c.b16 %v922, %v918
        %v1043 = vpack.c.b16 %v927, %v923
        %v1044 = vpack.c.b16 %v928, %v924
        %v1045 = vpack.c.b16 %v929, %v925
        %v1046 = vpack.c.b16 %v930, %v926
        %v1047 = vpack.c.b16 %v935, %v931
        %v1048 = vpack.c.b16 %v936, %v932
        %v1049 = vpack.c.b16 %v937, %v933
        %v1050 = vpack.c.b16 %v938, %v934
        %v1051 = vpack.c.b16 %v943, %v939
        %v1052 = vpack.c.b16 %v944, %v940
        %v1053 = vpack.c.b16 %v945, %v941
        %v1054 = vpack.c.b16 %v946, %v942
        %v1055 = vpack.c.b16 %v951, %v947
        %v1056 = vpack.c.b16 %v952, %v948
        %v1057 = vpack.c.b16 %v953, %v949
        %v1058 = vpack.c.b16 %v954, %v950
        %v1059 = vpack.c.b16 %v959, %v955
        %v1060 = vpack.c.b16 %v960, %v956
        %v1061 = vpack.c.b16 %v961, %v957
        %v1062 = vpack.c.b16 %v962, %v958
        %v1063 = vpack.c.b16 %v967, %v963
        %v1064 = vpack.c.b16 %v968, %v964
        %v1065 = vpack.c.b16 %v969, %v965
        %v1066 = vpack.c.b16 %v970, %v966
        %v1067 = vpack.c.b16 %v975, %v971
        %v1068 = vpack.c.b16 %v976, %v972
        %v1069 = vpack.c.b16 %v977, %v973
        %v1070 = vpack.c.b16 %v978, %v974
        %v1071 = vpack.c.b16 %v983, %v979
        %v1072 = vpack.c.b16 %v984, %v980
        %v1073 = vpack.c.b16 %v985, %v981
        %v1074 = vpack.c.b16 %v986, %v982
        %v1075 = vpack.c.b16 %v987, %v987
        %v1076 = vpack.c.b16 %v988, %v988
        %v1077 = vpack.c.b16 %v989, %v989
        %v1078 = vpack.c.b16 %v990, %v990
        %vm1163 = vcmask 711680
        %v1165 = vsel %vm1163, %v730, 0
        %vm1167 = vcmask 1042432
        %vm1168 = vcmask 1043456
        %v1169 = vsel %vm1167, 4294967295, 65535
        %v1170 = vsel %vm1168, %v1169, 0
        %v1172 = vand.u32 %v1075, %v1170
        %v1175 = vand.u32 %v1076, %v1170
        %v1178 = vand.u32 %v1077, %v1170
        %v1181 = vand.u32 %v1078, %v1170
        %1183 = vmatpush.bf16.msra.mxu0 %v1019
        %1184 = vmatpush.bf16.msra.mxu0 %v1015
        %1185 = vmatpush.bf16.msra.mxu0 %v1011
        %1186 = vmatpush.bf16.msra.mxu0 %v1007
        %1187 = vmatpush.bf16.msra.mxu0 %v1003
        %1188 = vmatpush.bf16.msra.mxu0 %v999
        %1189 = vmatpush.bf16.msra.mxu0 %v995
        %1190 = vmatpush.bf16.msra.mxu0 %v991
        %1191 = vmatmul.bf16.gmra.mxu0 %v728
        %v1192 = vpop.f32.mrf.mxu0
        %v1193 = vadd.f32 %v721, %v1192
        %v1194 = vpop.f32.mrf.mxu0
        %1195 = vdwg.mxu0
        %1196 = vmatpush.bf16.msra.mxu0 %v1051
        %1197 = vmatpush.bf16.msra.mxu0 %v1047
        %1198 = vmatpush.bf16.msra.mxu0 %v1043
        %1199 = vmatpush.bf16.msra.mxu0 %v1039
        %1200 = vmatpush.bf16.msra.mxu0 %v1035
        %1201 = vmatpush.bf16.msra.mxu0 %v1031
        %1202 = vmatpush.bf16.msra.mxu0 %v1027
        %1203 = vmatpush.bf16.msra.mxu0 %v1023
        %1204 = vmatmul.bf16.gmra.mxu0 %v729
        %v1205 = vpop.f32.mrf.mxu0
        %v1206 = vadd.f32 %v1193, %v1205
        %v1207 = vpop.f32.mrf.mxu0
        %1208 = vdwg.mxu0
        %1209 = vmatpush.bf16.msra.mxu0 0
        %1210 = vmatpush.bf16.msra.mxu0 0
        %1211 = vmatpush.bf16.msra.mxu0 %v1172
        %1212 = vmatpush.bf16.msra.mxu0 %v1071
        %1213 = vmatpush.bf16.msra.mxu0 %v1067
        %1214 = vmatpush.bf16.msra.mxu0 %v1063
        %1215 = vmatpush.bf16.msra.mxu0 %v1059
        %1216 = vmatpush.bf16.msra.mxu0 %v1055
        %1217 = vmatmul.bf16.gmra.mxu0 %v1165
        %v1218 = vpop.f32.mrf.mxu0
        %v1219 = vadd.f32 %v1206, %v1218
        %v1220 = vpop.f32.mrf.mxu0
        %1221 = vdwg.mxu0
        %1222 = vmatpush.bf16.msra.mxu0 %v1020
        %1223 = vmatpush.bf16.msra.mxu0 %v1016
        %1224 = vmatpush.bf16.msra.mxu0 %v1012
        %1225 = vmatpush.bf16.msra.mxu0 %v1008
        %1226 = vmatpush.bf16.msra.mxu0 %v1004
        %1227 = vmatpush.bf16.msra.mxu0 %v1000
        %1228 = vmatpush.bf16.msra.mxu0 %v996
        %1229 = vmatpush.bf16.msra.mxu0 %v992
        %1230 = vmatmul.bf16.gmra.mxu0 %v728
        %v1231 = vpop.f32.mrf.mxu0
        %v1232 = vadd.f32 %v721, %v1231
        %v1233 = vpop.f32.mrf.mxu0
        %1234 = vdwg.mxu0
        %1235 = vmatpush.bf16.msra.mxu0 %v1052
        %1236 = vmatpush.bf16.msra.mxu0 %v1048
        %1237 = vmatpush.bf16.msra.mxu0 %v1044
        %1238 = vmatpush.bf16.msra.mxu0 %v1040
        %1239 = vmatpush.bf16.msra.mxu0 %v1036
        %1240 = vmatpush.bf16.msra.mxu0 %v1032
        %1241 = vmatpush.bf16.msra.mxu0 %v1028
        %1242 = vmatpush.bf16.msra.mxu0 %v1024
        %1243 = vmatmul.bf16.gmra.mxu0 %v729
        %v1244 = vpop.f32.mrf.mxu0
        %v1245 = vadd.f32 %v1232, %v1244
        %v1246 = vpop.f32.mrf.mxu0
        %1247 = vdwg.mxu0
        %1248 = vmatpush.bf16.msra.mxu0 0
        %1249 = vmatpush.bf16.msra.mxu0 0
        %1250 = vmatpush.bf16.msra.mxu0 %v1175
        %1251 = vmatpush.bf16.msra.mxu0 %v1072
        %1252 = vmatpush.bf16.msra.mxu0 %v1068
        %1253 = vmatpush.bf16.msra.mxu0 %v1064
        %1254 = vmatpush.bf16.msra.mxu0 %v1060
        %1255 = vmatpush.bf16.msra.mxu0 %v1056
        %1256 = vmatmul.bf16.gmra.mxu0 %v1165
        %v1257 = vpop.f32.mrf.mxu0
        %v1258 = vadd.f32 %v1245, %v1257
        %v1259 = vpop.f32.mrf.mxu0
        %1260 = vdwg.mxu0
        %1261 = vmatpush.bf16.msra.mxu0 %v1021
        %1262 = vmatpush.bf16.msra.mxu0 %v1017
        %1263 = vmatpush.bf16.msra.mxu0 %v1013
        %1264 = vmatpush.bf16.msra.mxu0 %v1009
        %1265 = vmatpush.bf16.msra.mxu0 %v1005
        %1266 = vmatpush.bf16.msra.mxu0 %v1001
        %1267 = vmatpush.bf16.msra.mxu0 %v997
        %1268 = vmatpush.bf16.msra.mxu0 %v993
        %1269 = vmatmul.bf16.gmra.mxu0 %v728
        %v1270 = vpop.f32.mrf.mxu0
        %v1271 = vadd.f32 %v721, %v1270
        %v1272 = vpop.f32.mrf.mxu0
        %1273 = vdwg.mxu0
        %1274 = vmatpush.bf16.msra.mxu0 %v1053
        %1275 = vmatpush.bf16.msra.mxu0 %v1049
        %1276 = vmatpush.bf16.msra.mxu0 %v1045
        %1277 = vmatpush.bf16.msra.mxu0 %v1041
        %1278 = vmatpush.bf16.msra.mxu0 %v1037
        %1279 = vmatpush.bf16.msra.mxu0 %v1033
        %1280 = vmatpush.bf16.msra.mxu0 %v1029
        %1281 = vmatpush.bf16.msra.mxu0 %v1025
        %1282 = vmatmul.bf16.gmra.mxu0 %v729
        %v1283 = vpop.f32.mrf.mxu0
        %v1284 = vadd.f32 %v1271, %v1283
        %v1285 = vpop.f32.mrf.mxu0
        %1286 = vdwg.mxu0
        %1287 = vmatpush.bf16.msra.mxu0 0
        %1288 = vmatpush.bf16.msra.mxu0 0
        %1289 = vmatpush.bf16.msra.mxu0 %v1178
        %1290 = vmatpush.bf16.msra.mxu0 %v1073
        %1291 = vmatpush.bf16.msra.mxu0 %v1069
        %1292 = vmatpush.bf16.msra.mxu0 %v1065
        %1293 = vmatpush.bf16.msra.mxu0 %v1061
        %1294 = vmatpush.bf16.msra.mxu0 %v1057
        %1295 = vmatmul.bf16.gmra.mxu0 %v1165
        %v1296 = vpop.f32.mrf.mxu0
        %v1297 = vadd.f32 %v1284, %v1296
        %v1298 = vpop.f32.mrf.mxu0
        %1299 = vdwg.mxu0
        %1300 = vmatpush.bf16.msra.mxu0 %v1022
        %1301 = vmatpush.bf16.msra.mxu0 %v1018
        %1302 = vmatpush.bf16.msra.mxu0 %v1014
        %1303 = vmatpush.bf16.msra.mxu0 %v1010
        %1304 = vmatpush.bf16.msra.mxu0 %v1006
        %1305 = vmatpush.bf16.msra.mxu0 %v1002
        %1306 = vmatpush.bf16.msra.mxu0 %v998
        %1307 = vmatpush.bf16.msra.mxu0 %v994
        %1308 = vmatmul.bf16.gmra.mxu0 %v728
        %v1309 = vpop.f32.mrf.mxu0
        %v1310 = vadd.f32 %v721, %v1309
        %v1311 = vpop.f32.mrf.mxu0
        %1312 = vdwg.mxu0
        %1313 = vmatpush.bf16.msra.mxu0 %v1054
        %1314 = vmatpush.bf16.msra.mxu0 %v1050
        %1315 = vmatpush.bf16.msra.mxu0 %v1046
        %1316 = vmatpush.bf16.msra.mxu0 %v1042
        %1317 = vmatpush.bf16.msra.mxu0 %v1038
        %1318 = vmatpush.bf16.msra.mxu0 %v1034
        %1319 = vmatpush.bf16.msra.mxu0 %v1030
        %1320 = vmatpush.bf16.msra.mxu0 %v1026
        %1321 = vmatmul.bf16.gmra.mxu0 %v729
        %v1322 = vpop.f32.mrf.mxu0
        %v1323 = vadd.f32 %v1310, %v1322
        %v1324 = vpop.f32.mrf.mxu0
        %1325 = vdwg.mxu0
        %1326 = vmatpush.bf16.msra.mxu0 0
        %1327 = vmatpush.bf16.msra.mxu0 0
        %1328 = vmatpush.bf16.msra.mxu0 %v1181
        %1329 = vmatpush.bf16.msra.mxu0 %v1074
        %1330 = vmatpush.bf16.msra.mxu0 %v1070
        %1331 = vmatpush.bf16.msra.mxu0 %v1066
        %1332 = vmatpush.bf16.msra.mxu0 %v1062
        %1333 = vmatpush.bf16.msra.mxu0 %v1058
        %1334 = vmatmul.bf16.gmra.mxu0 %v1165
        %v1335 = vpop.f32.mrf.mxu0
        %v1336 = vadd.f32 %v1323, %v1335
        %v1337 = vpop.f32.mrf.mxu0
        %1338 = vdwg.mxu0
        %v1339 = vpack.c.bf16 %v1258, %v1219
        %v1340 = vpack.c.bf16 %v1336, %v1297
        %1341 = vst [vmem:[%s617] sm:$0xff] %v1339
        %1342 = vst [vmem:[%s617 + $0x8] sm:$0xff] %v1340
        %s1343 = sand.u32 %s109, 1
        %s1344 = scalar_lea.sflag [#allocation4], %s1343
        %s1345 = sand.u32 %s109, 1
        %s1346 = smul.addr %s1345, 16
        %s1347 = scalar_lea.vmem [#allocation3], %s1346
        // Predicated region
        $region85: #{tpu_custom_call.1} parent=79 // pred_check
          %p1348 = pneg %p119
        $region86: #{tpu_custom_call.1} parent=79 // pred_check_branch
          %1350 = sbr.rel (%p1348) target = $region88
        $region87: #{tpu_custom_call.1} parent=79 // pred_region
          %s1351 = smul.u32 4, %s22
          %s1352 = ssub.s32 46, %s1351
          %p1353 = scmp.lt.s32.totalorder %s1352, 4
          %s1354 = scalar_select %p1353, %s1352, 4
          %s1355 = smul.u32 4, %s1354
          %s1356 = ssub.s32 16, %s1355
          %s1357 = sshll.u32 %s1356, 4
          %1358 = vsyncadd %s1344, %s1357
          %p1359 = scmp.ne.s32.totalorder 0, %s1355
          %s1360 = smul.addr %s21, 46
          %s1361 = sadd.s32 %s1351, %s1360
          %s1362 = smul.addr %s1361, 4
          %s1363 = scalar_lea.hbm %s3, %s1362
          %s1364 = smul.u32 %s1354, 4
          %s1365 = sshll.u32 %s1364, 4
          %s1366 = sshll.u32 %s1347, 4
          %s1367 = int_to_ptr.vmem [resolvable:$true] %s1366
          %s1368 = sshll.u32 %s1363, 4
          %s1369 = int_to_ptr.hbm [resolvable:$true] %s1368
          %1371 = dma.vmem_to_hbm [thread:$0]  (%p1359), %s1367, %s1365, %s1369, %s1344
        $region88: #{tpu_custom_call.1} parent=79 // pred_fallthru
          _
      $region80: #{tpu_custom_call.1} parent=5 // pred_fallthru
        _
      %p1372 = scmp.le.s32.totalorder 2, %s12
      // Predicated region
      $region89: #{tpu_custom_call.1} parent=5 // pred_check
        %p1373 = pneg %p1372
      $region90: #{tpu_custom_call.1} parent=5 // pred_check_branch
        %1375 = sbr.rel (%p1373) target = $region92
      $region91: #{tpu_custom_call.1} parent=5 // pred_region
        %s1376 = ssub.s32 %s12, 2
        // Predicated region
        $region93: #{tpu_custom_call.1} parent=91 // pred_check
          %p1377 = pneg %p125
        $region94: #{tpu_custom_call.1} parent=91 // pred_check_branch
          %1379 = sbr.rel (%p1377) target = $region96
        $region95: #{tpu_custom_call.1} parent=91 // pred_region
          %s1380 = sand.u32 %s110, 1
          %s1381 = scalar_lea.sflag [#allocation4], %s1380
          %s1382 = sand.u32 %s110, 1
          %s1383 = smul.addr %s1382, 16
          %s1384 = scalar_lea.vmem [#allocation3], %s1383
          %1386 = dma.done %s1381, 256
        $region96: #{tpu_custom_call.1} parent=91 // pred_fallthru
          _
      $region92: #{tpu_custom_call.1} parent=5 // pred_fallthru
        _
    $region6: #{tpu_custom_call.1} parent=1 // loop_footer
      %s16 = sadd.s32 1, %s12
    $region7: #{tpu_custom_call.1} parent=1 // loop_footer_branch
      %11 = sbr.rel target = $region3
    $region8: #{tpu_custom_call.1} parent=1 // loop_exit
      _
    %1387 = vsyncpa [#allocation4], 1
    %s1388 = scalar_lea.sflag [#allocation4], 1
    %1389 = vsyncpa %s1388, 1

</llo_original>
